<compile_context>
chip_gen: v6e
topology: v6e:2x2x1
jax: 0.10.0
libtpu: 0.0.40
codegen_flags: <defaults>
</compile_context>

<pallas_src>
import jax
import jax.numpy as jnp
from jax import lax
from jax.experimental import pallas as pl
from jax.experimental.pallas import tpu as pltpu


# ------------------------- Kernel 1: GraphConv layer 0 -------------------------
def _gcn0_kernel(a_ref, x_ref, din_is_ref, dout_is_ref, w1_ref, b1_ref,
                 h1_ref, acc_ref):
    k = pl.program_id(1)
    tk = a_ref.shape[1]

    @pl.when(k == 0)
    def _():
        acc_ref[...] = jnp.zeros_like(acc_ref)

    # acc += A[i, k-tile] @ (D_out^{-1/2} X)[k-tile]  (exact 0/1 bf16 A, f32 acc).
    start = pl.multiple_of(k * tk, 256)
    xk = x_ref[pl.ds(start, tk), :]
    acc_ref[...] += jnp.dot(a_ref[...], xk, preferred_element_type=jnp.float32)

    @pl.when(k == pl.num_programs(1) - 1)
    def _():
        agg = acc_ref[...] * din_is_ref[...]            # D_in^{-1/2} row scale
        h = jnp.dot(agg, w1_ref[...],
                    preferred_element_type=jnp.float32) + b1_ref[...]
        h = jnp.maximum(h, 0.0)                         # relu
        # Pre-fold the next layer's D_out^{-1/2} into H1 rows; store bf16 so
        # layers 1/2 stream a half-width, pre-scaled operand.
        h1_ref[...] = (h * dout_is_ref[...]).astype(h1_ref.dtype)


# -------------- Kernel 2: fused GraphConv layers 1 & 2 + reparam ---------------
def _gcn12_kernel(a_ref, h1_ref, din_is_ref, w2_ref, b2_ref, w3_ref, b3_ref,
                  eps_ref, z_ref, acc_ref):
    k = pl.program_id(1)
    tk = a_ref.shape[1]

    @pl.when(k == 0)
    def _():
        acc_ref[...] = jnp.zeros_like(acc_ref)

    start = pl.multiple_of(k * tk, 256)
    hk = h1_ref[pl.ds(start, tk), :]                    # bf16, already D_out-scaled
    acc_ref[...] += jnp.dot(a_ref[...], hk, preferred_element_type=jnp.float32)

    @pl.when(k == pl.num_programs(1) - 1)
    def _():
        agg = acc_ref[...] * din_is_ref[...]            # D_in^{-1/2} row scale
        mean = jnp.dot(agg, w2_ref[...],
                       preferred_element_type=jnp.float32) + b2_ref[...]
        log_std = jnp.dot(agg, w3_ref[...],
                          preferred_element_type=jnp.float32) + b3_ref[...]
        z_ref[...] = mean + eps_ref[...] * jnp.exp(log_std)


# --------------------------- Kernel 3: decoder tiles ---------------------------
def _decoder_kernel(zi_ref, z_ref, out_ref):
    j = pl.program_id(1)
    tn = out_ref.shape[1]
    start = pl.multiple_of(j * tn, 256)
    zj = z_ref[pl.ds(start, tn), :]                     # resident z, sliced in VMEM
    # Transpose-free z_i @ z_j.T: contract the last (feature) axis of both.
    logits = lax.dot_general(
        zi_ref[...], zj,
        dimension_numbers=(((1,), (1,)), ((), ())),
        preferred_element_type=jnp.float32)
    # sigmoid(x) = 0.5 * tanh(0.5 x) + 0.5 : single EUP op, exactly in [0, 1].
    out_ref[...] = (0.5 * jnp.tanh(0.5 * logits) + 0.5).astype(out_ref.dtype)


def _round_up(x, m):
    return ((x + m - 1) // m) * m


def vgae_forward(adj, x, w1, b1, w2, b2, w3, b3, eps, *,
                 tile_m=256, max_tile_k=2048):
    """VGAE forward. `adj` is the raw dense 0/1 adjacency with A[dst, src];
    the 'both' normalization is folded into the kernels (degrees clamped >= 1),
    so A streams as exact bf16 and no f32 A_norm is materialized."""
    N, in_dim = x.shape
    h1_dim = w1.shape[1]
    h2_dim = w2.shape[1]

    # ---- tiling: row tile 256; k / lane tile up to 2048, multiple of tile_m ----
    n_pad = _round_up(N, tile_m)
    kt = pl.cdiv(n_pad, max_tile_k)
    tile_k = _round_up(pl.cdiv(n_pad, kt), tile_m)
    n_pad = tile_k * kt
    nt_m = n_pad // tile_m
    tile_n = tile_k                 # decoder lane tile (same divisibility)
    nt_n = kt

    # ---- degree scaling vectors (DGL GraphConv norm='both', clamp >= 1) ----
    out_deg = jnp.clip(adj.sum(axis=0), 1.0, None)      # source-side (columns of A)
    in_deg = jnp.clip(adj.sum(axis=1), 1.0, None)       # destination-side (rows of A)
    dout_is = jnp.ones((n_pad, 1), jnp.float32).at[:N, 0].set(out_deg ** -0.5)
    din_is = jnp.ones((n_pad, 1), jnp.float32).at[:N, 0].set(in_deg ** -0.5)

    # ---- pad & pre-scale operands (single fused pass each) ----
    a_p = jnp.zeros((n_pad, n_pad), jnp.bfloat16).at[:N, :N].set(
        adj.astype(jnp.bfloat16))                       # 0/1 -> bf16 is exact
    x_p = jnp.zeros((n_pad, in_dim), jnp.bfloat16).at[:N, :].set(
        (x * (out_deg[:, None] ** -0.5)).astype(jnp.bfloat16))
    eps_p = jnp.zeros((n_pad, h2_dim), jnp.float32).at[:N, :].set(eps)

    cparams_enc = pltpu.CompilerParams(
        dimension_semantics=("parallel", "arbitrary"),
        vmem_limit_bytes=48 * 1024 * 1024)
    cparams_dec = pltpu.CompilerParams(
        dimension_semantics=("parallel", "parallel"),
        vmem_limit_bytes=48 * 1024 * 1024)

    # ---- Layer 0: H1 = D_out^{-1/2} * relu(D_in^{-1/2} (A @ X_scaled) @ W1 + b1) ----
    h1 = pl.pallas_call(
        _gcn0_kernel,
        out_shape=jax.ShapeDtypeStruct((n_pad, h1_dim), jnp.bfloat16),
        grid=(nt_m, kt),
        in_specs=[
            pl.BlockSpec((tile_m, tile_k), lambda i, k: (i, k)),   # A (bf16, 0/1)
            pl.BlockSpec((n_pad, in_dim), lambda i, k: (0, 0)),    # X (resident)
            pl.BlockSpec((tile_m, 1), lambda i, k: (i, 0)),        # D_in^{-1/2}
            pl.BlockSpec((tile_m, 1), lambda i, k: (i, 0)),        # D_out^{-1/2}
            pl.BlockSpec((in_dim, h1_dim), lambda i, k: (0, 0)),   # W1 (resident)
            pl.BlockSpec((1, h1_dim), lambda i, k: (0, 0)),        # b1 (resident)
        ],
        out_specs=pl.BlockSpec((tile_m, h1_dim), lambda i, k: (i, 0)),
        scratch_shapes=[pltpu.VMEM((tile_m, in_dim), jnp.float32)],
        compiler_params=cparams_enc,
    )(a_p, x_p, din_is, dout_is, w1, b1)

    # ---- Layers 1 & 2 (fused) + reparameterization ----
    z = pl.pallas_call(
        _gcn12_kernel,
        out_shape=jax.ShapeDtypeStruct((n_pad, h2_dim), jnp.float32),
        grid=(nt_m, kt),
        in_specs=[
            pl.BlockSpec((tile_m, tile_k), lambda i, k: (i, k)),   # A (bf16, 0/1)
            pl.BlockSpec((n_pad, h1_dim), lambda i, k: (0, 0)),    # H1 (resident, bf16)
            pl.BlockSpec((tile_m, 1), lambda i, k: (i, 0)),        # D_in^{-1/2}
            pl.BlockSpec((h1_dim, h2_dim), lambda i, k: (0, 0)),   # W2 (resident)
            pl.BlockSpec((1, h2_dim), lambda i, k: (0, 0)),        # b2 (resident)
            pl.BlockSpec((h1_dim, h2_dim), lambda i, k: (0, 0)),   # W3 (resident)
            pl.BlockSpec((1, h2_dim), lambda i, k: (0, 0)),        # b3 (resident)
            pl.BlockSpec((tile_m, h2_dim), lambda i, k: (i, 0)),   # eps
        ],
        out_specs=pl.BlockSpec((tile_m, h2_dim), lambda i, k: (i, 0)),
        scratch_shapes=[pltpu.VMEM((tile_m, h1_dim), jnp.float32)],
        compiler_params=cparams_enc,
    )(a_p, h1, din_is, w2, b2, w3, b3, eps_p)

    # ---- Decoder: sigmoid(z @ z.T), lane-dense (tile_m, tile_n) bf16 tiles ----
    adj_rec = pl.pallas_call(
        _decoder_kernel,
        out_shape=jax.ShapeDtypeStruct((n_pad, n_pad), jnp.bfloat16),
        grid=(nt_m, nt_n),
        in_specs=[
            pl.BlockSpec((tile_m, h2_dim), lambda i, j: (i, 0)),   # z row tile i
            pl.BlockSpec((n_pad, h2_dim), lambda i, j: (0, 0)),    # z (resident)
        ],
        out_specs=pl.BlockSpec((tile_m, tile_n), lambda i, j: (i, j)),
        compiler_params=cparams_dec,
    )(z, z)

    # Return f32 probabilities (matches the torch module's output dtype).
    return adj_rec[:N, :N].astype(jnp.float32)


def normalize_adjacency(adj):
    """DGL GraphConv norm='both': D_in^{-1/2} A D_out^{-1/2}, degrees clamped >= 1."""
    out_deg = jnp.clip(adj.sum(axis=0), 1.0, None)
    in_deg = jnp.clip(adj.sum(axis=1), 1.0, None)
    return adj * (in_deg[:, None] ** -0.5) * (out_deg[None, :] ** -0.5)


def vgae_reference(a_norm, x, w1, b1, w2, b2, w3, b3, eps):
    """Pure-JAX f32 reference of the same forward pass (for tolerance check)."""
    h = jnp.maximum(a_norm @ x @ w1 + b1, 0.0)
    ah = a_norm @ h
    mean = ah @ w2 + b2
    log_std = ah @ w3 + b3
    z = mean + eps * jnp.exp(log_std)
    return jax.nn.sigmoid(z @ z.T)


if __name__ == "__main__":
    # Small shapes consistent with the module (non-multiple-of-tile N exercises padding).
    num_nodes, in_dim, hidden1_dim, hidden2_dim = 200, 8, 16, 8

    key = jax.random.PRNGKey(0)
    (k_emb, k_adj, k_w1, k_b1, k_w2, k_b2,
     k_w3, k_b3, k_eps) = jax.random.split(key, 9)

    # Deterministic synthetic parameter init (no checkpoint load).
    emb_table = jax.random.normal(k_emb, (num_nodes, in_dim), jnp.float32)
    w1 = jax.random.normal(k_w1, (in_dim, hidden1_dim), jnp.float32) * 0.2
    b1 = jax.random.normal(k_b1, (1, hidden1_dim), jnp.float32) * 0.1
    w2 = jax.random.normal(k_w2, (hidden1_dim, hidden2_dim), jnp.float32) * 0.2
    b2 = jax.random.normal(k_b2, (1, hidden2_dim), jnp.float32) * 0.1
    w3 = jax.random.normal(k_w3, (hidden1_dim, hidden2_dim), jnp.float32) * 0.2
    b3 = jax.random.normal(k_b3, (1, hidden2_dim), jnp.float32) * 0.1

    # Deterministic random graph (dense adjacency, A[dst, src] = 1 for edge src->dst).
    adj = (jax.random.uniform(k_adj, (num_nodes, num_nodes)) < 0.05).astype(jnp.float32)
    adj = adj.at[jnp.arange(num_nodes), jnp.arange(num_nodes)].set(1.0)  # self loops

    # Node ids + embedding lookup (JAX glue, equivalent to self.emb(nids)).
    nids = jnp.arange(num_nodes, dtype=jnp.int32)
    x = jnp.take(emb_table, nids, axis=0)

    # Reparameterization noise (equivalent to torch.randn(N, hidden2_dim)).
    eps = jax.random.normal(k_eps, (num_nodes, hidden2_dim), jnp.float32)

    adj_rec = vgae_forward(adj, x, w1, b1, w2, b2, w3, b3, eps)
    adj_rec = jax.block_until_ready(adj_rec)

    ref = vgae_reference(normalize_adjacency(adj), x, w1, b1, w2, b2, w3, b3, eps)

    assert adj_rec.shape == (num_nodes, num_nodes)
    assert bool(jnp.all(jnp.isfinite(adj_rec)))
    # tanh-based sigmoid is exactly bounded in [0, 1].
    assert bool(jnp.all((adj_rec >= 0.0) & (adj_rec <= 1.0)))
    max_err = float(jnp.max(jnp.abs(adj_rec - ref)))
    assert max_err < 6e-2, f"max abs error vs f32 reference too large: {max_err}"
    print("KERNEL_OK")
</pallas_src>

<mosaic_0001>
module attributes {stable_mosaic.version = 11 : i64} {
  func.func @_gcn0_kernel(%arg0: i32, %arg1: i32, %arg2: memref<256x256xbf16, #tpu.memory_space<vmem>>, %arg3: memref<256x8xbf16, #tpu.memory_space<vmem>>, %arg4: memref<256x1xf32, #tpu.memory_space<vmem>>, %arg5: memref<256x1xf32, #tpu.memory_space<vmem>>, %arg6: memref<8x16xf32, #tpu.memory_space<vmem>>, %arg7: memref<1x16xf32, #tpu.memory_space<vmem>>, %arg8: memref<256x16xbf16, #tpu.memory_space<vmem>>, %arg9: memref<256x8xf32, #tpu.memory_space<vmem>>) attributes {dimension_semantics = [#tpu.dimension_semantics<parallel>, #tpu.dimension_semantics<arbitrary>], iteration_bounds = array<i64: 1, 1>, scalar_prefetch = 0 : i64, scratch_operands = 1 : i64, tpu.core_type = #tpu.core_type<tc>, window_params = [{transform_indices = @transform_0, window_bounds = array<i64: 256, 256>}, {pipeline_mode = #tpu.pipeline_mode<synchronous>, transform_indices = @transform_1, window_bounds = array<i64: 256, 8>}, {transform_indices = @transform_2, window_bounds = array<i64: 256, 1>}, {transform_indices = @transform_3, window_bounds = array<i64: 256, 1>}, {pipeline_mode = #tpu.pipeline_mode<synchronous>, transform_indices = @transform_4, window_bounds = array<i64: 8, 16>}, {pipeline_mode = #tpu.pipeline_mode<synchronous>, transform_indices = @transform_5, window_bounds = array<i64: 1, 16>}, {transform_indices = @transform_6, window_bounds = array<i64: 256, 16>}]} {
    %c0_i32 = arith.constant 0 : i32
    %0 = arith.cmpi eq, %arg1, %c0_i32 : i32
    %1 = arith.extui %0 : i1 to i32
    %c0_i32_0 = arith.constant 0 : i32
    %2 = arith.cmpi ne, %1, %c0_i32_0 : i32
    scf.if %2 {
      %cst_9 = arith.constant 0.000000e+00 : f32
      %15 = vector.broadcast %cst_9 : f32 to vector<256x8xf32>
      %c0_10 = arith.constant 0 : index
      %c0_11 = arith.constant 0 : index
      %16 = vector.load %arg9[%c0_10, %c0_11] : memref<256x8xf32, #tpu.memory_space<vmem>>, vector<256x8xf32>
      tpu.vector_store %arg9[%c0_10, %c0_11], %15 {strides = array<i32>} : memref<256x8xf32, #tpu.memory_space<vmem>>, vector<256x8xf32>,
    } else {
    }
    %c256_i32 = arith.constant 256 : i32
    %3 = arith.muli %arg1, %c256_i32 : i32
    %4 = tpu.assume_multiple %3, 256 : i32
    %5 = arith.index_cast %4 : i32 to index
    %c0 = arith.constant 0 : index
    %6 = vector.load %arg3[%5, %c0] : memref<256x8xbf16, #tpu.memory_space<vmem>>, vector<256x8xbf16>
    %c0_1 = arith.constant 0 : index
    %c0_2 = arith.constant 0 : index
    %7 = vector.load %arg9[%c0_1, %c0_2] : memref<256x8xf32, #tpu.memory_space<vmem>>, vector<256x8xf32>
    %c0_3 = arith.constant 0 : index
    %c0_4 = arith.constant 0 : index
    %8 = vector.load %arg2[%c0_3, %c0_4] : memref<256x256xbf16, #tpu.memory_space<vmem>>, vector<256x256xbf16>
    %cst = arith.constant dense<0.000000e+00> : vector<256x8xf32>
    %9 = tpu.matmul %8, %6, %cst {dimension_numbers = #tpu.dot_dimension_numbers<[1], [0], [0], [1], [0, 0, 1, 1], [], []>} : vector<256x256xbf16>, vector<256x8xbf16>, vector<256x8xf32> -> vector<256x8xf32>
    %10 = arith.addf %7, %9 : vector<256x8xf32>
    %c0_5 = arith.constant 0 : index
    %c0_6 = arith.constant 0 : index
    %11 = vector.load %arg9[%c0_5, %c0_6] : memref<256x8xf32, #tpu.memory_space<vmem>>, vector<256x8xf32>
    tpu.vector_store %arg9[%c0_5, %c0_6], %10 {strides = array<i32>} : memref<256x8xf32, #tpu.memory_space<vmem>>, vector<256x8xf32>,
    %c0_i32_7 = arith.constant 0 : i32
    %12 = arith.cmpi eq, %arg1, %c0_i32_7 : i32
    %13 = arith.extui %12 : i1 to i32
    %c0_i32_8 = arith.constant 0 : i32
    %14 = arith.cmpi ne, %13, %c0_i32_8 : i32
    scf.if %14 {
      %c0_9 = arith.constant 0 : index
      %c0_10 = arith.constant 0 : index
      %15 = vector.load %arg9[%c0_9, %c0_10] : memref<256x8xf32, #tpu.memory_space<vmem>>, vector<256x8xf32>
      %c0_11 = arith.constant 0 : index
      %c0_12 = arith.constant 0 : index
      %16 = vector.load %arg4[%c0_11, %c0_12] : memref<256x1xf32, #tpu.memory_space<vmem>>, vector<256x1xf32>
      %17 = vector.broadcast %16 : vector<256x1xf32> to vector<256x8xf32>
      %18 = arith.mulf %15, %17 : vector<256x8xf32>
      %c0_13 = arith.constant 0 : index
      %c0_14 = arith.constant 0 : index
      %19 = vector.load %arg6[%c0_13, %c0_14] : memref<8x16xf32, #tpu.memory_space<vmem>>, vector<8x16xf32>
      %cst_15 = arith.constant dense<0.000000e+00> : vector<256x16xf32>
      %20 = tpu.matmul %18, %19, %cst_15 {dimension_numbers = #tpu.dot_dimension_numbers<[1], [0], [0], [1], [0, 0, 1, 1], [], []>} : vector<256x8xf32>, vector<8x16xf32>, vector<256x16xf32> -> vector<256x16xf32>
      %c0_16 = arith.constant 0 : index
      %c0_17 = arith.constant 0 : index
      %21 = vector.load %arg7[%c0_16, %c0_17] : memref<1x16xf32, #tpu.memory_space<vmem>>, vector<1x16xf32>
      %22 = vector.broadcast %21 : vector<1x16xf32> to vector<256x16xf32>
      %23 = arith.addf %20, %22 : vector<256x16xf32>
      %cst_18 = arith.constant 0.000000e+00 : f32
      %24 = vector.broadcast %cst_18 : f32 to vector<256x16xf32>
      %25 = arith.maximumf %23, %24 : vector<256x16xf32>
      %c0_19 = arith.constant 0 : index
      %c0_20 = arith.constant 0 : index
      %26 = vector.load %arg5[%c0_19, %c0_20] : memref<256x1xf32, #tpu.memory_space<vmem>>, vector<256x1xf32>
      %27 = vector.broadcast %26 : vector<256x1xf32> to vector<256x16xf32>
      %28 = arith.mulf %25, %27 : vector<256x16xf32>
      %29 = arith.truncf %28 : vector<256x16xf32> to vector<256x16xbf16>
      %c0_21 = arith.constant 0 : index
      %c0_22 = arith.constant 0 : index
      %30 = vector.load %arg8[%c0_21, %c0_22] : memref<256x16xbf16, #tpu.memory_space<vmem>>, vector<256x16xbf16>
      tpu.vector_store %arg8[%c0_21, %c0_22], %29 {strides = array<i32>} : memref<256x16xbf16, #tpu.memory_space<vmem>>, vector<256x16xbf16>,
    } else {
    }
    return
  }
  func.func @transform_0(%arg0: i32, %arg1: i32) -> (i32, i32) {
    %c0_i32 = arith.constant 0 : i32
    return %arg0, %arg1 : i32, i32
  }
  func.func @transform_1(%arg0: i32, %arg1: i32) -> (i32, i32) {
    %c0_i32 = arith.constant 0 : i32
    %c0_i32_0 = arith.constant 0 : i32
    %c0_i32_1 = arith.constant 0 : i32
    return %c0_i32, %c0_i32_0 : i32, i32
  }
  func.func @transform_2(%arg0: i32, %arg1: i32) -> (i32, i32) {
    %c0_i32 = arith.constant 0 : i32
    %c0_i32_0 = arith.constant 0 : i32
    return %arg0, %c0_i32 : i32, i32
  }
  func.func @transform_3(%arg0: i32, %arg1: i32) -> (i32, i32) {
    %c0_i32 = arith.constant 0 : i32
    %c0_i32_0 = arith.constant 0 : i32
    return %arg0, %c0_i32 : i32, i32
  }
  func.func @transform_4(%arg0: i32, %arg1: i32) -> (i32, i32) {
    %c0_i32 = arith.constant 0 : i32
    %c0_i32_0 = arith.constant 0 : i32
    %c0_i32_1 = arith.constant 0 : i32
    return %c0_i32, %c0_i32_0 : i32, i32
  }
  func.func @transform_5(%arg0: i32, %arg1: i32) -> (i32, i32) {
    %c0_i32 = arith.constant 0 : i32
    %c0_i32_0 = arith.constant 0 : i32
    %c0_i32_1 = arith.constant 0 : i32
    return %c0_i32, %c0_i32_0 : i32, i32
  }
  func.func @transform_6(%arg0: i32, %arg1: i32) -> (i32, i32) {
    %c0_i32 = arith.constant 0 : i32
    %c0_i32_0 = arith.constant 0 : i32
    return %arg0, %c0_i32 : i32, i32
  }
}

</mosaic_0001>

<llo_original>
// kernel: tpu_custom_call.1
$region0: #{tpu_custom_call.1}
  #allocation0 [shape = 'u32[]', space=smem, size = 0x4, offset = 0x4, fixed_abs, tag = 'smem constant byte address 0x4 - core index']
  #allocation1 [shape = 'u32[144,128]{1,0:T(1,128)}', space=vmem, size = 0x12000, scoped, tag = 'internal scratch']
  #allocation2 [shape = 'f32[256,8]{1,0:T(8,128)}', space=vmem, size = 0x20000, scoped, tag = 'scratch operand']
  %s0 = inlined_call_operand.vmem [shape: bf16[256,256], index: 0, kind: input, shape index: {}]
  %s1 = inlined_call_operand.vmem [shape: bf16[256,8], index: 1, kind: input, shape index: {}]
  %s2 = inlined_call_operand.vmem [shape: f32[256,1], index: 2, kind: input, shape index: {}]
  %s3 = inlined_call_operand.vmem [shape: f32[256,1], index: 3, kind: input, shape index: {}]
  %s4 = inlined_call_operand.vmem [shape: f32[8,16], index: 4, kind: input, shape index: {}]
  %s5 = inlined_call_operand.vmem [shape: f32[1,16], index: 5, kind: input, shape index: {}]
  %s6 = inlined_call_operand.vmem [shape: bf16[256,16], index: 6, kind: output, shape index: {}]
  %s7 = sld [smem:[#allocation0]]
  $region42: #{tpu_custom_call.1} parent=0
    _
  %s9 = ssub.s32 1, %s7
  %s10 = scalar_select 0, %s9, %s7
  // Predicated region
  $region2: #{tpu_custom_call.1} parent=0 // pred_check
    _
  $region3: #{tpu_custom_call.1} parent=0 // pred_check_branch
    %12 = sbr.rel (0) target = $region5
  $region4: #{tpu_custom_call.1} parent=0 // pred_region
    _
  $region5: #{tpu_custom_call.1} parent=0 // pred_fallthru
    _
  // Predicated region
  $region6: #{tpu_custom_call.1} parent=0 // pred_check
    _
  $region7: #{tpu_custom_call.1} parent=0 // pred_check_branch
    %14 = sbr.rel (0) target = $region9
  $region8: #{tpu_custom_call.1} parent=0 // pred_region
    _
  $region9: #{tpu_custom_call.1} parent=0 // pred_fallthru
    _
  // Predicated region
  $region10: #{tpu_custom_call.1} parent=0 // pred_check
    _
  $region11: #{tpu_custom_call.1} parent=0 // pred_check_branch
    %16 = sbr.rel (0) target = $region13
  $region12: #{tpu_custom_call.1} parent=0 // pred_region
    _
  $region13: #{tpu_custom_call.1} parent=0 // pred_fallthru
    _
  // Predicated region
  $region14: #{tpu_custom_call.1} parent=0 // pred_check
    _
  $region15: #{tpu_custom_call.1} parent=0 // pred_check_branch
    %18 = sbr.rel (0) target = $region17
  $region16: #{tpu_custom_call.1} parent=0 // pred_region
    _
  $region17: #{tpu_custom_call.1} parent=0 // pred_fallthru
    _
  // Predicated region
  $region18: #{tpu_custom_call.1} parent=0 // pred_check
    _
  $region19: #{tpu_custom_call.1} parent=0 // pred_check_branch
    %20 = sbr.rel (0) target = $region21
  $region20: #{tpu_custom_call.1} parent=0 // pred_region
    _
  $region21: #{tpu_custom_call.1} parent=0 // pred_fallthru
    _
  // Predicated region
  $region22: #{tpu_custom_call.1} parent=0 // pred_check
    _
  $region23: #{tpu_custom_call.1} parent=0 // pred_check_branch
    %22 = sbr.rel (0) target = $region25
  $region24: #{tpu_custom_call.1} parent=0 // pred_region
    _
  $region25: #{tpu_custom_call.1} parent=0 // pred_fallthru
    _
  %p24 = scmp.eq.s32.totalorder 0, 0
  // Predicated region
  $region26: #{tpu_custom_call.1} parent=0 // pred_check
    %p25 = pneg %p24
  $region27: #{tpu_custom_call.1} parent=0 // pred_check_branch
    %27 = sbr.rel (%p25) target = $region29
  $region28: #{tpu_custom_call.1} parent=0 // pred_region
    %vm28 = vcmask 64512
    %29 = vst.msk [vmem:[#allocation2] sm:$0xff] %vm28, 0.0
    %30 = vst.msk [vmem:[#allocation2 + $0x8] sm:$0xff] %vm28, 0.0
    %31 = vst.msk [vmem:[#allocation2 + $0x10] sm:$0xff] %vm28, 0.0
    %32 = vst.msk [vmem:[#allocation2 + $0x18] sm:$0xff] %vm28, 0.0
    %33 = vst.msk [vmem:[#allocation2 + $0x20] sm:$0xff] %vm28, 0.0
    %34 = vst.msk [vmem:[#allocation2 + $0x28] sm:$0xff] %vm28, 0.0
    %35 = vst.msk [vmem:[#allocation2 + $0x30] sm:$0xff] %vm28, 0.0
    %36 = vst.msk [vmem:[#allocation2 + $0x38] sm:$0xff] %vm28, 0.0
    %37 = vst.msk [vmem:[#allocation2 + $0x40] sm:$0xff] %vm28, 0.0
    %38 = vst.msk [vmem:[#allocation2 + $0x48] sm:$0xff] %vm28, 0.0
    %39 = vst.msk [vmem:[#allocation2 + $0x50] sm:$0xff] %vm28, 0.0
    %40 = vst.msk [vmem:[#allocation2 + $0x58] sm:$0xff] %vm28, 0.0
    %41 = vst.msk [vmem:[#allocation2 + $0x60] sm:$0xff] %vm28, 0.0
    %42 = vst.msk [vmem:[#allocation2 + $0x68] sm:$0xff] %vm28, 0.0
    %43 = vst.msk [vmem:[#allocation2 + $0x70] sm:$0xff] %vm28, 0.0
    %44 = vst.msk [vmem:[#allocation2 + $0x78] sm:$0xff] %vm28, 0.0
    %45 = vst.msk [vmem:[#allocation2 + $0x80] sm:$0xff] %vm28, 0.0
    %46 = vst.msk [vmem:[#allocation2 + $0x88] sm:$0xff] %vm28, 0.0
    %47 = vst.msk [vmem:[#allocation2 + $0x90] sm:$0xff] %vm28, 0.0
    %48 = vst.msk [vmem:[#allocation2 + $0x98] sm:$0xff] %vm28, 0.0
    %49 = vst.msk [vmem:[#allocation2 + $0xa0] sm:$0xff] %vm28, 0.0
    %50 = vst.msk [vmem:[#allocation2 + $0xa8] sm:$0xff] %vm28, 0.0
    %51 = vst.msk [vmem:[#allocation2 + $0xb0] sm:$0xff] %vm28, 0.0
    %52 = vst.msk [vmem:[#allocation2 + $0xb8] sm:$0xff] %vm28, 0.0
    %53 = vst.msk [vmem:[#allocation2 + $0xc0] sm:$0xff] %vm28, 0.0
    %54 = vst.msk [vmem:[#allocation2 + $0xc8] sm:$0xff] %vm28, 0.0
    %55 = vst.msk [vmem:[#allocation2 + $0xd0] sm:$0xff] %vm28, 0.0
    %56 = vst.msk [vmem:[#allocation2 + $0xd8] sm:$0xff] %vm28, 0.0
    %57 = vst.msk [vmem:[#allocation2 + $0xe0] sm:$0xff] %vm28, 0.0
    %58 = vst.msk [vmem:[#allocation2 + $0xe8] sm:$0xff] %vm28, 0.0
    %59 = vst.msk [vmem:[#allocation2 + $0xf0] sm:$0xff] %vm28, 0.0
    %60 = vst.msk [vmem:[#allocation2 + $0xf8] sm:$0xff] %vm28, 0.0
  $region29: #{tpu_custom_call.1} parent=0 // pred_fallthru
    _
  %s61 = smul.u32 0, 256
  %s62 = sshra.s32 %s61, 3
  %s63 = sand.u32 %s61, 7
  %s64 = smul.addr %s62, 4
  %s65 = scalar_lea.vmem %s1, %s64
  %v66 = vld [vmem:[%s65] sm:$0xf]
  %v67 = vld [vmem:[%s65 + $0x4] sm:$0xf]
  %v68 = vld [vmem:[%s65 + $0x8] sm:$0xf]
  %v69 = vld [vmem:[%s65 + $0xc] sm:$0xf]
  %v70 = vld [vmem:[%s65 + $0x10] sm:$0xf]
  %v71 = vld [vmem:[%s65 + $0x14] sm:$0xf]
  %v72 = vld [vmem:[%s65 + $0x18] sm:$0xf]
  %v73 = vld [vmem:[%s65 + $0x1c] sm:$0xf]
  %v74 = vld [vmem:[%s65 + $0x20] sm:$0xf]
  %v75 = vld [vmem:[%s65 + $0x24] sm:$0xf]
  %v76 = vld [vmem:[%s65 + $0x28] sm:$0xf]
  %v77 = vld [vmem:[%s65 + $0x2c] sm:$0xf]
  %v78 = vld [vmem:[%s65 + $0x30] sm:$0xf]
  %v79 = vld [vmem:[%s65 + $0x34] sm:$0xf]
  %v80 = vld [vmem:[%s65 + $0x38] sm:$0xf]
  %v81 = vld [vmem:[%s65 + $0x3c] sm:$0xf]
  %v82 = vld [vmem:[%s65 + $0x40] sm:$0xf]
  %v83 = vld [vmem:[%s65 + $0x44] sm:$0xf]
  %v84 = vld [vmem:[%s65 + $0x48] sm:$0xf]
  %v85 = vld [vmem:[%s65 + $0x4c] sm:$0xf]
  %v86 = vld [vmem:[%s65 + $0x50] sm:$0xf]
  %v87 = vld [vmem:[%s65 + $0x54] sm:$0xf]
  %v88 = vld [vmem:[%s65 + $0x58] sm:$0xf]
  %v89 = vld [vmem:[%s65 + $0x5c] sm:$0xf]
  %v90 = vld [vmem:[%s65 + $0x60] sm:$0xf]
  %v91 = vld [vmem:[%s65 + $0x64] sm:$0xf]
  %v92 = vld [vmem:[%s65 + $0x68] sm:$0xf]
  %v93 = vld [vmem:[%s65 + $0x6c] sm:$0xf]
  %v94 = vld [vmem:[%s65 + $0x70] sm:$0xf]
  %v95 = vld [vmem:[%s65 + $0x74] sm:$0xf]
  %v96 = vld [vmem:[%s65 + $0x78] sm:$0xf]
  %v97 = vld [vmem:[%s65 + $0x7c] sm:$0xf]
  %v98 = vld [vmem:[#allocation2] sm:$0xff]
  %v99 = vld [vmem:[#allocation2 + $0x8] sm:$0xff]
  %v100 = vld [vmem:[#allocation2 + $0x10] sm:$0xff]
  %v101 = vld [vmem:[#allocation2 + $0x18] sm:$0xff]
  %v102 = vld [vmem:[#allocation2 + $0x20] sm:$0xff]
  %v103 = vld [vmem:[#allocation2 + $0x28] sm:$0xff]
  %v104 = vld [vmem:[#allocation2 + $0x30] sm:$0xff]
  %v105 = vld [vmem:[#allocation2 + $0x38] sm:$0xff]
  %v106 = vld [vmem:[#allocation2 + $0x40] sm:$0xff]
  %v107 = vld [vmem:[#allocation2 + $0x48] sm:$0xff]
  %v108 = vld [vmem:[#allocation2 + $0x50] sm:$0xff]
  %v109 = vld [vmem:[#allocation2 + $0x58] sm:$0xff]
  %v110 = vld [vmem:[#allocation2 + $0x60] sm:$0xff]
  %v111 = vld [vmem:[#allocation2 + $0x68] sm:$0xff]
  %v112 = vld [vmem:[#allocation2 + $0x70] sm:$0xff]
  %v113 = vld [vmem:[#allocation2 + $0x78] sm:$0xff]
  %v114 = vld [vmem:[#allocation2 + $0x80] sm:$0xff]
  %v115 = vld [vmem:[#allocation2 + $0x88] sm:$0xff]
  %v116 = vld [vmem:[#allocation2 + $0x90] sm:$0xff]
  %v117 = vld [vmem:[#allocation2 + $0x98] sm:$0xff]
  %v118 = vld [vmem:[#allocation2 + $0xa0] sm:$0xff]
  %v119 = vld [vmem:[#allocation2 + $0xa8] sm:$0xff]
  %v120 = vld [vmem:[#allocation2 + $0xb0] sm:$0xff]
  %v121 = vld [vmem:[#allocation2 + $0xb8] sm:$0xff]
  %v122 = vld [vmem:[#allocation2 + $0xc0] sm:$0xff]
  %v123 = vld [vmem:[#allocation2 + $0xc8] sm:$0xff]
  %v124 = vld [vmem:[#allocation2 + $0xd0] sm:$0xff]
  %v125 = vld [vmem:[#allocation2 + $0xd8] sm:$0xff]
  %v126 = vld [vmem:[#allocation2 + $0xe0] sm:$0xff]
  %v127 = vld [vmem:[#allocation2 + $0xe8] sm:$0xff]
  %v128 = vld [vmem:[#allocation2 + $0xf0] sm:$0xff]
  %v129 = vld [vmem:[#allocation2 + $0xf8] sm:$0xff]
  %v130 = vld [vmem:[%s0] sm:$0xff]
  %v131 = vld [vmem:[%s0 + $0x8] sm:$0xff]
  %v132 = vld [vmem:[%s0 + $0x10] sm:$0xff]
  %v133 = vld [vmem:[%s0 + $0x18] sm:$0xff]
  %v134 = vld [vmem:[%s0 + $0x20] sm:$0xff]
  %v135 = vld [vmem:[%s0 + $0x28] sm:$0xff]
  %v136 = vld [vmem:[%s0 + $0x30] sm:$0xff]
  %v137 = vld [vmem:[%s0 + $0x38] sm:$0xff]
  %v138 = vld [vmem:[%s0 + $0x40] sm:$0xff]
  %v139 = vld [vmem:[%s0 + $0x48] sm:$0xff]
  %v140 = vld [vmem:[%s0 + $0x50] sm:$0xff]
  %v141 = vld [vmem:[%s0 + $0x58] sm:$0xff]
  %v142 = vld [vmem:[%s0 + $0x60] sm:$0xff]
  %v143 = vld [vmem:[%s0 + $0x68] sm:$0xff]
  %v144 = vld [vmem:[%s0 + $0x70] sm:$0xff]
  %v145 = vld [vmem:[%s0 + $0x78] sm:$0xff]
  %v146 = vld [vmem:[%s0 + $0x80] sm:$0xff]
  %v147 = vld [vmem:[%s0 + $0x88] sm:$0xff]
  %v148 = vld [vmem:[%s0 + $0x90] sm:$0xff]
  %v149 = vld [vmem:[%s0 + $0x98] sm:$0xff]
  %v150 = vld [vmem:[%s0 + $0xa0] sm:$0xff]
  %v151 = vld [vmem:[%s0 + $0xa8] sm:$0xff]
  %v152 = vld [vmem:[%s0 + $0xb0] sm:$0xff]
  %v153 = vld [vmem:[%s0 + $0xb8] sm:$0xff]
  %v154 = vld [vmem:[%s0 + $0xc0] sm:$0xff]
  %v155 = vld [vmem:[%s0 + $0xc8] sm:$0xff]
  %v156 = vld [vmem:[%s0 + $0xd0] sm:$0xff]
  %v157 = vld [vmem:[%s0 + $0xd8] sm:$0xff]
  %v158 = vld [vmem:[%s0 + $0xe0] sm:$0xff]
  %v159 = vld [vmem:[%s0 + $0xe8] sm:$0xff]
  %v160 = vld [vmem:[%s0 + $0xf0] sm:$0xff]
  %v161 = vld [vmem:[%s0 + $0xf8] sm:$0xff]
  %v194 = vunpack.c.l.b16 %v130
  %v195 = vunpack.c.h.b16 %v130
  %v196 = vunpack.c.l.b16 %v131
  %v197 = vunpack.c.h.b16 %v131
  %v198 = vunpack.c.l.b16 %v132
  %v199 = vunpack.c.h.b16 %v132
  %v200 = vunpack.c.l.b16 %v133
  %v201 = vunpack.c.h.b16 %v133
  %v202 = vunpack.c.l.b16 %v134
  %v203 = vunpack.c.h.b16 %v134
  %v204 = vunpack.c.l.b16 %v135
  %v205 = vunpack.c.h.b16 %v135
  %v206 = vunpack.c.l.b16 %v136
  %v207 = vunpack.c.h.b16 %v136
  %v208 = vunpack.c.l.b16 %v137
  %v209 = vunpack.c.h.b16 %v137
  %v210 = vunpack.c.l.b16 %v138
  %v211 = vunpack.c.h.b16 %v138
  %v212 = vunpack.c.l.b16 %v139
  %v213 = vunpack.c.h.b16 %v139
  %v214 = vunpack.c.l.b16 %v140
  %v215 = vunpack.c.h.b16 %v140
  %v216 = vunpack.c.l.b16 %v141
  %v217 = vunpack.c.h.b16 %v141
  %v218 = vunpack.c.l.b16 %v142
  %v219 = vunpack.c.h.b16 %v142
  %v220 = vunpack.c.l.b16 %v143
  %v221 = vunpack.c.h.b16 %v143
  %v222 = vunpack.c.l.b16 %v144
  %v223 = vunpack.c.h.b16 %v144
  %v224 = vunpack.c.l.b16 %v145
  %v225 = vunpack.c.h.b16 %v145
  %v226 = vunpack.c.l.b16 %v146
  %v227 = vunpack.c.h.b16 %v146
  %v228 = vunpack.c.l.b16 %v147
  %v229 = vunpack.c.h.b16 %v147
  %v230 = vunpack.c.l.b16 %v148
  %v231 = vunpack.c.h.b16 %v148
  %v232 = vunpack.c.l.b16 %v149
  %v233 = vunpack.c.h.b16 %v149
  %v234 = vunpack.c.l.b16 %v150
  %v235 = vunpack.c.h.b16 %v150
  %v236 = vunpack.c.l.b16 %v151
  %v237 = vunpack.c.h.b16 %v151
  %v238 = vunpack.c.l.b16 %v152
  %v239 = vunpack.c.h.b16 %v152
  %v240 = vunpack.c.l.b16 %v153
  %v241 = vunpack.c.h.b16 %v153
  %v242 = vunpack.c.l.b16 %v154
  %v243 = vunpack.c.h.b16 %v154
  %v244 = vunpack.c.l.b16 %v155
  %v245 = vunpack.c.h.b16 %v155
  %v246 = vunpack.c.l.b16 %v156
  %v247 = vunpack.c.h.b16 %v156
  %v248 = vunpack.c.l.b16 %v157
  %v249 = vunpack.c.h.b16 %v157
  %v250 = vunpack.c.l.b16 %v158
  %v251 = vunpack.c.h.b16 %v158
  %v252 = vunpack.c.l.b16 %v159
  %v253 = vunpack.c.h.b16 %v159
  %v254 = vunpack.c.l.b16 %v160
  %v255 = vunpack.c.h.b16 %v160
  %v256 = vunpack.c.l.b16 %v161
  %v257 = vunpack.c.h.b16 %v161
  %v258 = vpack.c.b16 %v196, %v194
  %v259 = vpack.c.b16 %v197, %v195
  %v260 = vpack.c.b16 %v200, %v198
  %v261 = vpack.c.b16 %v201, %v199
  %v262 = vpack.c.b16 %v204, %v202
  %v263 = vpack.c.b16 %v205, %v203
  %v264 = vpack.c.b16 %v208, %v206
  %v265 = vpack.c.b16 %v209, %v207
  %v266 = vpack.c.b16 %v212, %v210
  %v267 = vpack.c.b16 %v213, %v211
  %v268 = vpack.c.b16 %v216, %v214
  %v269 = vpack.c.b16 %v217, %v215
  %v270 = vpack.c.b16 %v220, %v218
  %v271 = vpack.c.b16 %v221, %v219
  %v272 = vpack.c.b16 %v224, %v222
  %v273 = vpack.c.b16 %v225, %v223
  %v274 = vpack.c.b16 %v228, %v226
  %v275 = vpack.c.b16 %v229, %v227
  %v276 = vpack.c.b16 %v232, %v230
  %v277 = vpack.c.b16 %v233, %v231
  %v278 = vpack.c.b16 %v236, %v234
  %v279 = vpack.c.b16 %v237, %v235
  %v280 = vpack.c.b16 %v240, %v238
  %v281 = vpack.c.b16 %v241, %v239
  %v282 = vpack.c.b16 %v244, %v242
  %v283 = vpack.c.b16 %v245, %v243
  %v284 = vpack.c.b16 %v248, %v246
  %v285 = vpack.c.b16 %v249, %v247
  %v286 = vpack.c.b16 %v252, %v250
  %v287 = vpack.c.b16 %v253, %v251
  %v288 = vpack.c.b16 %v256, %v254
  %v289 = vpack.c.b16 %v257, %v255
  %v354 = vunpack.c.l.b16 %v66
  %v355 = vunpack.c.l.b16 %v67
  %v356 = vunpack.c.l.b16 %v68
  %v357 = vunpack.c.l.b16 %v69
  %v358 = vunpack.c.l.b16 %v70
  %v359 = vunpack.c.l.b16 %v71
  %v360 = vunpack.c.l.b16 %v72
  %v361 = vunpack.c.l.b16 %v73
  %v362 = vunpack.c.l.b16 %v74
  %v363 = vunpack.c.l.b16 %v75
  %v364 = vunpack.c.l.b16 %v76
  %v365 = vunpack.c.l.b16 %v77
  %v366 = vunpack.c.l.b16 %v78
  %v367 = vunpack.c.l.b16 %v79
  %v368 = vunpack.c.l.b16 %v80
  %v369 = vunpack.c.l.b16 %v81
  %v370 = vunpack.c.l.b16 %v82
  %v371 = vunpack.c.l.b16 %v83
  %v372 = vunpack.c.l.b16 %v84
  %v373 = vunpack.c.l.b16 %v85
  %v374 = vunpack.c.l.b16 %v86
  %v375 = vunpack.c.l.b16 %v87
  %v376 = vunpack.c.l.b16 %v88
  %v377 = vunpack.c.l.b16 %v89
  %v378 = vunpack.c.l.b16 %v90
  %v379 = vunpack.c.l.b16 %v91
  %v380 = vunpack.c.l.b16 %v92
  %v381 = vunpack.c.l.b16 %v93
  %v382 = vunpack.c.l.b16 %v94
  %v383 = vunpack.c.l.b16 %v95
  %v384 = vunpack.c.l.b16 %v96
  %v385 = vunpack.c.l.b16 %v97
  %v386 = vpack.c.b16 %v355, %v354
  %v387 = vpack.c.b16 %v357, %v356
  %v388 = vpack.c.b16 %v359, %v358
  %v389 = vpack.c.b16 %v361, %v360
  %v390 = vpack.c.b16 %v363, %v362
  %v391 = vpack.c.b16 %v365, %v364
  %v392 = vpack.c.b16 %v367, %v366
  %v393 = vpack.c.b16 %v369, %v368
  %v394 = vpack.c.b16 %v371, %v370
  %v395 = vpack.c.b16 %v373, %v372
  %v396 = vpack.c.b16 %v375, %v374
  %v397 = vpack.c.b16 %v377, %v376
  %v398 = vpack.c.b16 %v379, %v378
  %v399 = vpack.c.b16 %v381, %v380
  %v400 = vpack.c.b16 %v383, %v382
  %v401 = vpack.c.b16 %v385, %v384
  %418 = vmatprep.subr.bf16.mxu0 0
  %419 = vmatpush1.bf16.msra.mxu0 %v393
  %420 = vmatprep.subr.bf16.mxu0 0
  %421 = vmatpush1.bf16.msra.mxu0 %v392
  %422 = vmatprep.subr.bf16.mxu0 0
  %423 = vmatpush1.bf16.msra.mxu0 %v391
  %424 = vmatprep.subr.bf16.mxu0 0
  %425 = vmatpush1.bf16.msra.mxu0 %v390
  %426 = vmatprep.subr.bf16.mxu0 0
  %427 = vmatpush1.bf16.msra.mxu0 %v389
  %428 = vmatprep.subr.bf16.mxu0 0
  %429 = vmatpush1.bf16.msra.mxu0 %v388
  %430 = vmatprep.subr.bf16.mxu0 0
  %431 = vmatpush1.bf16.msra.mxu0 %v387
  %432 = vmatprep.subr.bf16.mxu0 0
  %433 = vmatpush1.bf16.msra.mxu0 %v386
  %434 = vmatprep.subr.bf16.mxu0 0
  %435 = vmatpush2.bf16.msra.mxu0 %v401
  %436 = vmatprep.subr.bf16.mxu0 0
  %437 = vmatpush2.bf16.msra.mxu0 %v400
  %438 = vmatprep.subr.bf16.mxu0 0
  %439 = vmatpush2.bf16.msra.mxu0 %v399
  %440 = vmatprep.subr.bf16.mxu0 0
  %441 = vmatpush2.bf16.msra.mxu0 %v398
  %442 = vmatprep.subr.bf16.mxu0 0
  %443 = vmatpush2.bf16.msra.mxu0 %v397
  %444 = vmatprep.subr.bf16.mxu0 0
  %445 = vmatpush2.bf16.msra.mxu0 %v396
  %446 = vmatprep.subr.bf16.mxu0 0
  %447 = vmatpush2.bf16.msra.mxu0 %v395
  %448 = vmatprep.subr.bf16.mxu0 0
  %449 = vmatpush2.bf16.msra.mxu0 %v394
  %450 = vmatprep.mubr.bf16.mxu0 %v259
  %451 = vmatmul.mubr.bf16.gmra.mxu0 %v258
  %v452 = vpop.f32.mrf.mxu0
  %v453 = vadd.f32 0.0, %v452
  %v454 = vpop.f32.mrf.mxu0
  %v455 = vpop.f32.mrf.mxu0
  %v456 = vadd.f32 0.0, %v455
  %v457 = vpop.f32.mrf.mxu0
  %458 = vmatprep.mubr.bf16.mxu0 %v261
  %459 = vmatmul.mubr.bf16.gmra.mxu0 %v260
  %v460 = vpop.f32.mrf.mxu0
  %v461 = vadd.f32 0.0, %v460
  %v462 = vpop.f32.mrf.mxu0
  %v463 = vpop.f32.mrf.mxu0
  %v464 = vadd.f32 0.0, %v463
  %v465 = vpop.f32.mrf.mxu0
  %466 = vmatprep.mubr.bf16.mxu0 %v263
  %467 = vmatmul.mubr.bf16.gmra.mxu0 %v262
  %v468 = vpop.f32.mrf.mxu0
  %v469 = vadd.f32 0.0, %v468
  %v470 = vpop.f32.mrf.mxu0
  %v471 = vpop.f32.mrf.mxu0
  %v472 = vadd.f32 0.0, %v471
  %v473 = vpop.f32.mrf.mxu0
  %474 = vmatprep.mubr.bf16.mxu0 %v265
  %475 = vmatmul.mubr.bf16.gmra.mxu0 %v264
  %v476 = vpop.f32.mrf.mxu0
  %v477 = vadd.f32 0.0, %v476
  %v478 = vpop.f32.mrf.mxu0
  %v479 = vpop.f32.mrf.mxu0
  %v480 = vadd.f32 0.0, %v479
  %v481 = vpop.f32.mrf.mxu0
  %482 = vmatprep.mubr.bf16.mxu0 %v267
  %483 = vmatmul.mubr.bf16.gmra.mxu0 %v266
  %v484 = vpop.f32.mrf.mxu0
  %v485 = vadd.f32 0.0, %v484
  %v486 = vpop.f32.mrf.mxu0
  %v487 = vpop.f32.mrf.mxu0
  %v488 = vadd.f32 0.0, %v487
  %v489 = vpop.f32.mrf.mxu0
  %490 = vmatprep.mubr.bf16.mxu0 %v269
  %491 = vmatmul.mubr.bf16.gmra.mxu0 %v268
  %v492 = vpop.f32.mrf.mxu0
  %v493 = vadd.f32 0.0, %v492
  %v494 = vpop.f32.mrf.mxu0
  %v495 = vpop.f32.mrf.mxu0
  %v496 = vadd.f32 0.0, %v495
  %v497 = vpop.f32.mrf.mxu0
  %498 = vmatprep.mubr.bf16.mxu0 %v271
  %499 = vmatmul.mubr.bf16.gmra.mxu0 %v270
  %v500 = vpop.f32.mrf.mxu0
  %v501 = vadd.f32 0.0, %v500
  %v502 = vpop.f32.mrf.mxu0
  %v503 = vpop.f32.mrf.mxu0
  %v504 = vadd.f32 0.0, %v503
  %v505 = vpop.f32.mrf.mxu0
  %506 = vmatprep.mubr.bf16.mxu0 %v273
  %507 = vmatmul.mubr.bf16.gmra.mxu0 %v272
  %v508 = vpop.f32.mrf.mxu0
  %v509 = vadd.f32 0.0, %v508
  %v510 = vpop.f32.mrf.mxu0
  %v511 = vpop.f32.mrf.mxu0
  %v512 = vadd.f32 0.0, %v511
  %v513 = vpop.f32.mrf.mxu0
  %514 = vmatprep.mubr.bf16.mxu0 %v275
  %515 = vmatmul.mubr.bf16.gmra.mxu0 %v274
  %v516 = vpop.f32.mrf.mxu0
  %v517 = vadd.f32 0.0, %v516
  %v518 = vpop.f32.mrf.mxu0
  %v519 = vpop.f32.mrf.mxu0
  %v520 = vadd.f32 0.0, %v519
  %v521 = vpop.f32.mrf.mxu0
  %522 = vmatprep.mubr.bf16.mxu0 %v277
  %523 = vmatmul.mubr.bf16.gmra.mxu0 %v276
  %v524 = vpop.f32.mrf.mxu0
  %v525 = vadd.f32 0.0, %v524
  %v526 = vpop.f32.mrf.mxu0
  %v527 = vpop.f32.mrf.mxu0
  %v528 = vadd.f32 0.0, %v527
  %v529 = vpop.f32.mrf.mxu0
  %530 = vmatprep.mubr.bf16.mxu0 %v279
  %531 = vmatmul.mubr.bf16.gmra.mxu0 %v278
  %v532 = vpop.f32.mrf.mxu0
  %v533 = vadd.f32 0.0, %v532
  %v534 = vpop.f32.mrf.mxu0
  %v535 = vpop.f32.mrf.mxu0
  %v536 = vadd.f32 0.0, %v535
  %v537 = vpop.f32.mrf.mxu0
  %538 = vmatprep.mubr.bf16.mxu0 %v281
  %539 = vmatmul.mubr.bf16.gmra.mxu0 %v280
  %v540 = vpop.f32.mrf.mxu0
  %v541 = vadd.f32 0.0, %v540
  %v542 = vpop.f32.mrf.mxu0
  %v543 = vpop.f32.mrf.mxu0
  %v544 = vadd.f32 0.0, %v543
  %v545 = vpop.f32.mrf.mxu0
  %546 = vmatprep.mubr.bf16.mxu0 %v283
  %547 = vmatmul.mubr.bf16.gmra.mxu0 %v282
  %v548 = vpop.f32.mrf.mxu0
  %v549 = vadd.f32 0.0, %v548
  %v550 = vpop.f32.mrf.mxu0
  %v551 = vpop.f32.mrf.mxu0
  %v552 = vadd.f32 0.0, %v551
  %v553 = vpop.f32.mrf.mxu0
  %554 = vmatprep.mubr.bf16.mxu0 %v285
  %555 = vmatmul.mubr.bf16.gmra.mxu0 %v284
  %v556 = vpop.f32.mrf.mxu0
  %v557 = vadd.f32 0.0, %v556
  %v558 = vpop.f32.mrf.mxu0
  %v559 = vpop.f32.mrf.mxu0
  %v560 = vadd.f32 0.0, %v559
  %v561 = vpop.f32.mrf.mxu0
  %562 = vmatprep.mubr.bf16.mxu0 %v287
  %563 = vmatmul.mubr.bf16.gmra.mxu0 %v286
  %v564 = vpop.f32.mrf.mxu0
  %v565 = vadd.f32 0.0, %v564
  %v566 = vpop.f32.mrf.mxu0
  %v567 = vpop.f32.mrf.mxu0
  %v568 = vadd.f32 0.0, %v567
  %v569 = vpop.f32.mrf.mxu0
  %570 = vmatprep.mubr.bf16.mxu0 %v289
  %571 = vmatmul.mubr.bf16.gmra.mxu0 %v288
  %v572 = vpop.f32.mrf.mxu0
  %v573 = vadd.f32 0.0, %v572
  %v574 = vpop.f32.mrf.mxu0
  %v575 = vpop.f32.mrf.mxu0
  %v576 = vadd.f32 0.0, %v575
  %v577 = vpop.f32.mrf.mxu0
  %578 = vdwg.mxu0
  %v579 = vadd.f32 %v98, %v453
  %v580 = vadd.f32 %v99, %v456
  %v581 = vadd.f32 %v100, %v461
  %v582 = vadd.f32 %v101, %v464
  %v583 = vadd.f32 %v102, %v469
  %v584 = vadd.f32 %v103, %v472
  %v585 = vadd.f32 %v104, %v477
  %v586 = vadd.f32 %v105, %v480
  %v587 = vadd.f32 %v106, %v485
  %v588 = vadd.f32 %v107, %v488
  %v589 = vadd.f32 %v108, %v493
  %v590 = vadd.f32 %v109, %v496
  %v591 = vadd.f32 %v110, %v501
  %v592 = vadd.f32 %v111, %v504
  %v593 = vadd.f32 %v112, %v509
  %v594 = vadd.f32 %v113, %v512
  %v595 = vadd.f32 %v114, %v517
  %v596 = vadd.f32 %v115, %v520
  %v597 = vadd.f32 %v116, %v525
  %v598 = vadd.f32 %v117, %v528
  %v599 = vadd.f32 %v118, %v533
  %v600 = vadd.f32 %v119, %v536
  %v601 = vadd.f32 %v120, %v541
  %v602 = vadd.f32 %v121, %v544
  %v603 = vadd.f32 %v122, %v549
  %v604 = vadd.f32 %v123, %v552
  %v605 = vadd.f32 %v124, %v557
  %v606 = vadd.f32 %v125, %v560
  %v607 = vadd.f32 %v126, %v565
  %v608 = vadd.f32 %v127, %v568
  %v609 = vadd.f32 %v128, %v573
  %v610 = vadd.f32 %v129, %v576
  %vm611 = vcmask 64512
  %612 = vst.msk [vmem:[#allocation2] sm:$0xff] %vm611, %v579
  %613 = vst.msk [vmem:[#allocation2 + $0x8] sm:$0xff] %vm611, %v580
  %614 = vst.msk [vmem:[#allocation2 + $0x10] sm:$0xff] %vm611, %v581
  %615 = vst.msk [vmem:[#allocation2 + $0x18] sm:$0xff] %vm611, %v582
  %616 = vst.msk [vmem:[#allocation2 + $0x20] sm:$0xff] %vm611, %v583
  %617 = vst.msk [vmem:[#allocation2 + $0x28] sm:$0xff] %vm611, %v584
  %618 = vst.msk [vmem:[#allocation2 + $0x30] sm:$0xff] %vm611, %v585
  %619 = vst.msk [vmem:[#allocation2 + $0x38] sm:$0xff] %vm611, %v586
  %620 = vst.msk [vmem:[#allocation2 + $0x40] sm:$0xff] %vm611, %v587
  %621 = vst.msk [vmem:[#allocation2 + $0x48] sm:$0xff] %vm611, %v588
  %622 = vst.msk [vmem:[#allocation2 + $0x50] sm:$0xff] %vm611, %v589
  %623 = vst.msk [vmem:[#allocation2 + $0x58] sm:$0xff] %vm611, %v590
  %624 = vst.msk [vmem:[#allocation2 + $0x60] sm:$0xff] %vm611, %v591
  %625 = vst.msk [vmem:[#allocation2 + $0x68] sm:$0xff] %vm611, %v592
  %626 = vst.msk [vmem:[#allocation2 + $0x70] sm:$0xff] %vm611, %v593
  %627 = vst.msk [vmem:[#allocation2 + $0x78] sm:$0xff] %vm611, %v594
  %628 = vst.msk [vmem:[#allocation2 + $0x80] sm:$0xff] %vm611, %v595
  %629 = vst.msk [vmem:[#allocation2 + $0x88] sm:$0xff] %vm611, %v596
  %630 = vst.msk [vmem:[#allocation2 + $0x90] sm:$0xff] %vm611, %v597
  %631 = vst.msk [vmem:[#allocation2 + $0x98] sm:$0xff] %vm611, %v598
  %632 = vst.msk [vmem:[#allocation2 + $0xa0] sm:$0xff] %vm611, %v599
  %633 = vst.msk [vmem:[#allocation2 + $0xa8] sm:$0xff] %vm611, %v600
  %634 = vst.msk [vmem:[#allocation2 + $0xb0] sm:$0xff] %vm611, %v601
  %635 = vst.msk [vmem:[#allocation2 + $0xb8] sm:$0xff] %vm611, %v602
  %636 = vst.msk [vmem:[#allocation2 + $0xc0] sm:$0xff] %vm611, %v603
  %637 = vst.msk [vmem:[#allocation2 + $0xc8] sm:$0xff] %vm611, %v604
  %638 = vst.msk [vmem:[#allocation2 + $0xd0] sm:$0xff] %vm611, %v605
  %639 = vst.msk [vmem:[#allocation2 + $0xd8] sm:$0xff] %vm611, %v606
  %640 = vst.msk [vmem:[#allocation2 + $0xe0] sm:$0xff] %vm611, %v607
  %641 = vst.msk [vmem:[#allocation2 + $0xe8] sm:$0xff] %vm611, %v608
  %642 = vst.msk [vmem:[#allocation2 + $0xf0] sm:$0xff] %vm611, %v609
  %643 = vst.msk [vmem:[#allocation2 + $0xf8] sm:$0xff] %vm611, %v610
  // Predicated region
  $region30: #{tpu_custom_call.1} parent=0 // pred_check
    %p644 = pneg %p24
  $region31: #{tpu_custom_call.1} parent=0 // pred_check_branch
    %646 = sbr.rel (%p644) target = $region33
  $region32: #{tpu_custom_call.1} parent=0 // pred_region
    %v647 = vld [vmem:[#allocation2] sm:$0xff]
    %v648 = vld [vmem:[#allocation2 + $0x8] sm:$0xff]
    %v649 = vld [vmem:[#allocation2 + $0x10] sm:$0xff]
    %v650 = vld [vmem:[#allocation2 + $0x18] sm:$0xff]
    %v651 = vld [vmem:[#allocation2 + $0x20] sm:$0xff]
    %v652 = vld [vmem:[#allocation2 + $0x28] sm:$0xff]
    %v653 = vld [vmem:[#allocation2 + $0x30] sm:$0xff]
    %v654 = vld [vmem:[#allocation2 + $0x38] sm:$0xff]
    %v655 = vld [vmem:[#allocation2 + $0x40] sm:$0xff]
    %v656 = vld [vmem:[#allocation2 + $0x48] sm:$0xff]
    %v657 = vld [vmem:[#allocation2 + $0x50] sm:$0xff]
    %v658 = vld [vmem:[#allocation2 + $0x58] sm:$0xff]
    %v659 = vld [vmem:[#allocation2 + $0x60] sm:$0xff]
    %v660 = vld [vmem:[#allocation2 + $0x68] sm:$0xff]
    %v661 = vld [vmem:[#allocation2 + $0x70] sm:$0xff]
    %v662 = vld [vmem:[#allocation2 + $0x78] sm:$0xff]
    %v663 = vld [vmem:[#allocation2 + $0x80] sm:$0xff]
    %v664 = vld [vmem:[#allocation2 + $0x88] sm:$0xff]
    %v665 = vld [vmem:[#allocation2 + $0x90] sm:$0xff]
    %v666 = vld [vmem:[#allocation2 + $0x98] sm:$0xff]
    %v667 = vld [vmem:[#allocation2 + $0xa0] sm:$0xff]
    %v668 = vld [vmem:[#allocation2 + $0xa8] sm:$0xff]
    %v669 = vld [vmem:[#allocation2 + $0xb0] sm:$0xff]
    %v670 = vld [vmem:[#allocation2 + $0xb8] sm:$0xff]
    %v671 = vld [vmem:[#allocation2 + $0xc0] sm:$0xff]
    %v672 = vld [vmem:[#allocation2 + $0xc8] sm:$0xff]
    %v673 = vld [vmem:[#allocation2 + $0xd0] sm:$0xff]
    %v674 = vld [vmem:[#allocation2 + $0xd8] sm:$0xff]
    %v675 = vld [vmem:[#allocation2 + $0xe0] sm:$0xff]
    %v676 = vld [vmem:[#allocation2 + $0xe8] sm:$0xff]
    %v677 = vld [vmem:[#allocation2 + $0xf0] sm:$0xff]
    %v678 = vld [vmem:[#allocation2 + $0xf8] sm:$0xff]
    %v679 = vld [vmem:[%s2] sm:$0xff]
    %v680 = vld [vmem:[%s2 + $0x8] sm:$0xff]
    %v681 = vld [vmem:[%s2 + $0x10] sm:$0xff]
    %v682 = vld [vmem:[%s2 + $0x18] sm:$0xff]
    %v683 = vld [vmem:[%s2 + $0x20] sm:$0xff]
    %v684 = vld [vmem:[%s2 + $0x28] sm:$0xff]
    %v685 = vld [vmem:[%s2 + $0x30] sm:$0xff]
    %v686 = vld [vmem:[%s2 + $0x38] sm:$0xff]
    %v687 = vld [vmem:[%s2 + $0x40] sm:$0xff]
    %v688 = vld [vmem:[%s2 + $0x48] sm:$0xff]
    %v689 = vld [vmem:[%s2 + $0x50] sm:$0xff]
    %v690 = vld [vmem:[%s2 + $0x58] sm:$0xff]
    %v691 = vld [vmem:[%s2 + $0x60] sm:$0xff]
    %v692 = vld [vmem:[%s2 + $0x68] sm:$0xff]
    %v693 = vld [vmem:[%s2 + $0x70] sm:$0xff]
    %v694 = vld [vmem:[%s2 + $0x78] sm:$0xff]
    %v695 = vld [vmem:[%s2 + $0x80] sm:$0xff]
    %v696 = vld [vmem:[%s2 + $0x88] sm:$0xff]
    %v697 = vld [vmem:[%s2 + $0x90] sm:$0xff]
    %v698 = vld [vmem:[%s2 + $0x98] sm:$0xff]
    %v699 = vld [vmem:[%s2 + $0xa0] sm:$0xff]
    %v700 = vld [vmem:[%s2 + $0xa8] sm:$0xff]
    %v701 = vld [vmem:[%s2 + $0xb0] sm:$0xff]
    %v702 = vld [vmem:[%s2 + $0xb8] sm:$0xff]
    %v703 = vld [vmem:[%s2 + $0xc0] sm:$0xff]
    %v704 = vld [vmem:[%s2 + $0xc8] sm:$0xff]
    %v705 = vld [vmem:[%s2 + $0xd0] sm:$0xff]
    %v706 = vld [vmem:[%s2 + $0xd8] sm:$0xff]
    %v707 = vld [vmem:[%s2 + $0xe0] sm:$0xff]
    %v708 = vld [vmem:[%s2 + $0xe8] sm:$0xff]
    %v709 = vld [vmem:[%s2 + $0xf0] sm:$0xff]
    %v710 = vld [vmem:[%s2 + $0xf8] sm:$0xff]
    %712 = vset.pattern.permute.xlu0 0
    %713 = vperm.xlu0 %712, %v679
    %v714 = vpop.permute.xlu0 %713
    %717 = vset.pattern.permute.xlu0 0
    %718 = vperm.xlu0 %717, %v680
    %v719 = vpop.permute.xlu0 %718
    %722 = vset.pattern.permute.xlu0 0
    %723 = vperm.xlu0 %722, %v681
    %v724 = vpop.permute.xlu0 %723
    %727 = vset.pattern.permute.xlu0 0
    %728 = vperm.xlu0 %727, %v682
    %v729 = vpop.permute.xlu0 %728
    %732 = vset.pattern.permute.xlu0 0
    %733 = vperm.xlu0 %732, %v683
    %v734 = vpop.permute.xlu0 %733
    %737 = vset.pattern.permute.xlu0 0
    %738 = vperm.xlu0 %737, %v684
    %v739 = vpop.permute.xlu0 %738
    %742 = vset.pattern.permute.xlu0 0
    %743 = vperm.xlu0 %742, %v685
    %v744 = vpop.permute.xlu0 %743
    %747 = vset.pattern.permute.xlu0 0
    %748 = vperm.xlu0 %747, %v686
    %v749 = vpop.permute.xlu0 %748
    %752 = vset.pattern.permute.xlu0 0
    %753 = vperm.xlu0 %752, %v687
    %v754 = vpop.permute.xlu0 %753
    %757 = vset.pattern.permute.xlu0 0
    %758 = vperm.xlu0 %757, %v688
    %v759 = vpop.permute.xlu0 %758
    %762 = vset.pattern.permute.xlu0 0
    %763 = vperm.xlu0 %762, %v689
    %v764 = vpop.permute.xlu0 %763
    %767 = vset.pattern.permute.xlu0 0
    %768 = vperm.xlu0 %767, %v690
    %v769 = vpop.permute.xlu0 %768
    %772 = vset.pattern.permute.xlu0 0
    %773 = vperm.xlu0 %772, %v691
    %v774 = vpop.permute.xlu0 %773
    %777 = vset.pattern.permute.xlu0 0
    %778 = vperm.xlu0 %777, %v692
    %v779 = vpop.permute.xlu0 %778
    %782 = vset.pattern.permute.xlu0 0
    %783 = vperm.xlu0 %782, %v693
    %v784 = vpop.permute.xlu0 %783
    %787 = vset.pattern.permute.xlu0 0
    %788 = vperm.xlu0 %787, %v694
    %v789 = vpop.permute.xlu0 %788
    %792 = vset.pattern.permute.xlu0 0
    %793 = vperm.xlu0 %792, %v695
    %v794 = vpop.permute.xlu0 %793
    %797 = vset.pattern.permute.xlu0 0
    %798 = vperm.xlu0 %797, %v696
    %v799 = vpop.permute.xlu0 %798
    %802 = vset.pattern.permute.xlu0 0
    %803 = vperm.xlu0 %802, %v697
    %v804 = vpop.permute.xlu0 %803
    %807 = vset.pattern.permute.xlu0 0
    %808 = vperm.xlu0 %807, %v698
    %v809 = vpop.permute.xlu0 %808
    %812 = vset.pattern.permute.xlu0 0
    %813 = vperm.xlu0 %812, %v699
    %v814 = vpop.permute.xlu0 %813
    %817 = vset.pattern.permute.xlu0 0
    %818 = vperm.xlu0 %817, %v700
    %v819 = vpop.permute.xlu0 %818
    %822 = vset.pattern.permute.xlu0 0
    %823 = vperm.xlu0 %822, %v701
    %v824 = vpop.permute.xlu0 %823
    %827 = vset.pattern.permute.xlu0 0
    %828 = vperm.xlu0 %827, %v702
    %v829 = vpop.permute.xlu0 %828
    %832 = vset.pattern.permute.xlu0 0
    %833 = vperm.xlu0 %832, %v703
    %v834 = vpop.permute.xlu0 %833
    %837 = vset.pattern.permute.xlu0 0
    %838 = vperm.xlu0 %837, %v704
    %v839 = vpop.permute.xlu0 %838
    %842 = vset.pattern.permute.xlu0 0
    %843 = vperm.xlu0 %842, %v705
    %v844 = vpop.permute.xlu0 %843
    %847 = vset.pattern.permute.xlu0 0
    %848 = vperm.xlu0 %847, %v706
    %v849 = vpop.permute.xlu0 %848
    %852 = vset.pattern.permute.xlu0 0
    %853 = vperm.xlu0 %852, %v707
    %v854 = vpop.permute.xlu0 %853
    %857 = vset.pattern.permute.xlu0 0
    %858 = vperm.xlu0 %857, %v708
    %v859 = vpop.permute.xlu0 %858
    %862 = vset.pattern.permute.xlu0 0
    %863 = vperm.xlu0 %862, %v709
    %v864 = vpop.permute.xlu0 %863
    %867 = vset.pattern.permute.xlu0 0
    %868 = vperm.xlu0 %867, %v710
    %v869 = vpop.permute.xlu0 %868
    %v871 = vmul.f32 %v647, %v714
    %v872 = vmul.f32 %v648, %v719
    %v873 = vmul.f32 %v649, %v724
    %v874 = vmul.f32 %v650, %v729
    %v875 = vmul.f32 %v651, %v734
    %v876 = vmul.f32 %v652, %v739
    %v877 = vmul.f32 %v653, %v744
    %v878 = vmul.f32 %v654, %v749
    %v879 = vmul.f32 %v655, %v754
    %v880 = vmul.f32 %v656, %v759
    %v881 = vmul.f32 %v657, %v764
    %v882 = vmul.f32 %v658, %v769
    %v883 = vmul.f32 %v659, %v774
    %v884 = vmul.f32 %v660, %v779
    %v885 = vmul.f32 %v661, %v784
    %v886 = vmul.f32 %v662, %v789
    %v887 = vmul.f32 %v663, %v794
    %v888 = vmul.f32 %v664, %v799
    %v889 = vmul.f32 %v665, %v804
    %v890 = vmul.f32 %v666, %v809
    %v891 = vmul.f32 %v667, %v814
    %v892 = vmul.f32 %v668, %v819
    %v893 = vmul.f32 %v669, %v824
    %v894 = vmul.f32 %v670, %v829
    %v895 = vmul.f32 %v671, %v834
    %v896 = vmul.f32 %v672, %v839
    %v897 = vmul.f32 %v673, %v844
    %v898 = vmul.f32 %v674, %v849
    %v899 = vmul.f32 %v675, %v854
    %v900 = vmul.f32 %v676, %v859
    %v901 = vmul.f32 %v677, %v864
    %v902 = vmul.f32 %v678, %v869
    %v903 = vld [vmem:[%s4] sm:$0xff]
    %v904 = vld [vmem:[%s5] sm:$0x1]
    %v906 = vlaneseq
    %v907 = vshrl.u32 %v906, 7
    %v908 = vsub.s32 0, %v907
    %v909 = vrot.slane %v904, %v908
    %v912 = vsel %vm611, %v871, 0
    %v915 = vsel %vm611, %v872, 0
    %v918 = vsel %vm611, %v873, 0
    %v921 = vsel %vm611, %v874, 0
    %v924 = vsel %vm611, %v875, 0
    %v927 = vsel %vm611, %v876, 0
    %v930 = vsel %vm611, %v877, 0
    %v933 = vsel %vm611, %v878, 0
    %v936 = vsel %vm611, %v879, 0
    %v939 = vsel %vm611, %v880, 0
    %v942 = vsel %vm611, %v881, 0
    %v945 = vsel %vm611, %v882, 0
    %v948 = vsel %vm611, %v883, 0
    %v951 = vsel %vm611, %v884, 0
    %v954 = vsel %vm611, %v885, 0
    %v957 = vsel %vm611, %v886, 0
    %v960 = vsel %vm611, %v887, 0
    %v963 = vsel %vm611, %v888, 0
    %v966 = vsel %vm611, %v889, 0
    %v969 = vsel %vm611, %v890, 0
    %v972 = vsel %vm611, %v891, 0
    %v975 = vsel %vm611, %v892, 0
    %v978 = vsel %vm611, %v893, 0
    %v981 = vsel %vm611, %v894, 0
    %v984 = vsel %vm611, %v895, 0
    %v987 = vsel %vm611, %v896, 0
    %v990 = vsel %vm611, %v897, 0
    %v993 = vsel %vm611, %v898, 0
    %v996 = vsel %vm611, %v899, 0
    %v999 = vsel %vm611, %v900, 0
    %v1002 = vsel %vm611, %v901, 0
    %v1005 = vsel %vm611, %v902, 0
    %1007 = vmatprep.subr.mxu0 0.0
    %1008 = vmatpush1.msra.mxu0 0.0
    %1009 = vmatprep.subr.mxu0 0.0
    %1010 = vmatpush1.msra.mxu0 0.0
    %1011 = vmatprep.subr.mxu0 0.0
    %1012 = vmatpush1.msra.mxu0 0.0
    %1013 = vmatprep.subr.mxu0 0.0
    %1014 = vmatpush1.msra.mxu0 0.0
    %1015 = vmatprep.subr.mxu0 0.0
    %1016 = vmatpush1.msra.mxu0 0.0
    %1017 = vmatprep.subr.mxu0 0.0
    %1018 = vmatpush1.msra.mxu0 0.0
    %1019 = vmatprep.subr.mxu0 0.0
    %1020 = vmatpush1.msra.mxu0 0.0
    %1021 = vmatprep.subr.mxu0 0.0
    %1022 = vmatpush1.msra.mxu0 0.0
    %1023 = vmatprep.subr.mxu0 0.0
    %1024 = vmatpush1.msra.mxu0 0.0
    %1025 = vmatprep.subr.mxu0 0.0
    %1026 = vmatpush1.msra.mxu0 0.0
    %1027 = vmatprep.subr.mxu0 0.0
    %1028 = vmatpush1.msra.mxu0 0.0
    %1029 = vmatprep.subr.mxu0 0.0
    %1030 = vmatpush1.msra.mxu0 0.0
    %1031 = vmatprep.subr.mxu0 0.0
    %1032 = vmatpush1.msra.mxu0 0.0
    %1033 = vmatprep.subr.mxu0 0.0
    %1034 = vmatpush1.msra.mxu0 0.0
    %1035 = vmatprep.subr.mxu0 0.0
    %1036 = vmatpush1.msra.mxu0 0.0
    %1037 = vmatprep.subr.mxu0 0.0
    %1038 = vmatpush1.msra.mxu0 %v903
    %1039 = vmatprep.subr.mxu0 0.0
    %1040 = vmatpush2.msra.mxu0 0.0
    %1041 = vmatprep.subr.mxu0 0.0
    %1042 = vmatpush2.msra.mxu0 0.0
    %1043 = vmatprep.subr.mxu0 0.0
    %1044 = vmatpush2.msra.mxu0 0.0
    %1045 = vmatprep.subr.mxu0 0.0
    %1046 = vmatpush2.msra.mxu0 0.0
    %1047 = vmatprep.subr.mxu0 0.0
    %1048 = vmatpush2.msra.mxu0 0.0
    %1049 = vmatprep.subr.mxu0 0.0
    %1050 = vmatpush2.msra.mxu0 0.0
    %1051 = vmatprep.subr.mxu0 0.0
    %1052 = vmatpush2.msra.mxu0 0.0
    %1053 = vmatprep.subr.mxu0 0.0
    %1054 = vmatpush2.msra.mxu0 0.0
    %1055 = vmatprep.subr.mxu0 0.0
    %1056 = vmatpush2.msra.mxu0 0.0
    %1057 = vmatprep.subr.mxu0 0.0
    %1058 = vmatpush2.msra.mxu0 0.0
    %1059 = vmatprep.subr.mxu0 0.0
    %1060 = vmatpush2.msra.mxu0 0.0
    %1061 = vmatprep.subr.mxu0 0.0
    %1062 = vmatpush2.msra.mxu0 0.0
    %1063 = vmatprep.subr.mxu0 0.0
    %1064 = vmatpush2.msra.mxu0 0.0
    %1065 = vmatprep.subr.mxu0 0.0
    %1066 = vmatpush2.msra.mxu0 0.0
    %1067 = vmatprep.subr.mxu0 0.0
    %1068 = vmatpush2.msra.mxu0 0.0
    %1069 = vmatprep.subr.mxu0 0.0
    %1070 = vmatpush2.msra.mxu0 0.0
    %1071 = vmatprep.mubr.f32.mxu0 0.0
    %1072 = vmatmul.mubr.f32.gmra.mxu0 %v912
    %v1073 = vpop.f32.mrf.mxu0
    %v1074 = vadd.f32 %v909, %v1073
    %v1075 = vpop.f32.mrf.mxu0
    %1076 = vmatprep.mubr.f32.mxu0 0.0
    %1077 = vmatmul.mubr.f32.gmra.mxu0 %v915
    %v1078 = vpop.f32.mrf.mxu0
    %v1079 = vadd.f32 %v909, %v1078
    %v1080 = vpop.f32.mrf.mxu0
    %1081 = vmatprep.mubr.f32.mxu0 0.0
    %1082 = vmatmul.mubr.f32.gmra.mxu0 %v918
    %v1083 = vpop.f32.mrf.mxu0
    %v1084 = vadd.f32 %v909, %v1083
    %v1085 = vpop.f32.mrf.mxu0
    %1086 = vmatprep.mubr.f32.mxu0 0.0
    %1087 = vmatmul.mubr.f32.gmra.mxu0 %v921
    %v1088 = vpop.f32.mrf.mxu0
    %v1089 = vadd.f32 %v909, %v1088
    %v1090 = vpop.f32.mrf.mxu0
    %1091 = vmatprep.mubr.f32.mxu0 0.0
    %1092 = vmatmul.mubr.f32.gmra.mxu0 %v924
    %v1093 = vpop.f32.mrf.mxu0
    %v1094 = vadd.f32 %v909, %v1093
    %v1095 = vpop.f32.mrf.mxu0
    %1096 = vmatprep.mubr.f32.mxu0 0.0
    %1097 = vmatmul.mubr.f32.gmra.mxu0 %v927
    %v1098 = vpop.f32.mrf.mxu0
    %v1099 = vadd.f32 %v909, %v1098
    %v1100 = vpop.f32.mrf.mxu0
    %1101 = vmatprep.mubr.f32.mxu0 0.0
    %1102 = vmatmul.mubr.f32.gmra.mxu0 %v930
    %v1103 = vpop.f32.mrf.mxu0
    %v1104 = vadd.f32 %v909, %v1103
    %v1105 = vpop.f32.mrf.mxu0
    %1106 = vmatprep.mubr.f32.mxu0 0.0
    %1107 = vmatmul.mubr.f32.gmra.mxu0 %v933
    %v1108 = vpop.f32.mrf.mxu0
    %v1109 = vadd.f32 %v909, %v1108
    %v1110 = vpop.f32.mrf.mxu0
    %1111 = vmatprep.mubr.f32.mxu0 0.0
    %1112 = vmatmul.mubr.f32.gmra.mxu0 %v936
    %v1113 = vpop.f32.mrf.mxu0
    %v1114 = vadd.f32 %v909, %v1113
    %v1115 = vpop.f32.mrf.mxu0
    %1116 = vmatprep.mubr.f32.mxu0 0.0
    %1117 = vmatmul.mubr.f32.gmra.mxu0 %v939
    %v1118 = vpop.f32.mrf.mxu0
    %v1119 = vadd.f32 %v909, %v1118
    %v1120 = vpop.f32.mrf.mxu0
    %1121 = vmatprep.mubr.f32.mxu0 0.0
    %1122 = vmatmul.mubr.f32.gmra.mxu0 %v942
    %v1123 = vpop.f32.mrf.mxu0
    %v1124 = vadd.f32 %v909, %v1123
    %v1125 = vpop.f32.mrf.mxu0
    %1126 = vmatprep.mubr.f32.mxu0 0.0
    %1127 = vmatmul.mubr.f32.gmra.mxu0 %v945
    %v1128 = vpop.f32.mrf.mxu0
    %v1129 = vadd.f32 %v909, %v1128
    %v1130 = vpop.f32.mrf.mxu0
    %1131 = vmatprep.mubr.f32.mxu0 0.0
    %1132 = vmatmul.mubr.f32.gmra.mxu0 %v948
    %v1133 = vpop.f32.mrf.mxu0
    %v1134 = vadd.f32 %v909, %v1133
    %v1135 = vpop.f32.mrf.mxu0
    %1136 = vmatprep.mubr.f32.mxu0 0.0
    %1137 = vmatmul.mubr.f32.gmra.mxu0 %v951
    %v1138 = vpop.f32.mrf.mxu0
    %v1139 = vadd.f32 %v909, %v1138
    %v1140 = vpop.f32.mrf.mxu0
    %1141 = vmatprep.mubr.f32.mxu0 0.0
    %1142 = vmatmul.mubr.f32.gmra.mxu0 %v954
    %v1143 = vpop.f32.mrf.mxu0
    %v1144 = vadd.f32 %v909, %v1143
    %v1145 = vpop.f32.mrf.mxu0
    %1146 = vmatprep.mubr.f32.mxu0 0.0
    %1147 = vmatmul.mubr.f32.gmra.mxu0 %v957
    %v1148 = vpop.f32.mrf.mxu0
    %v1149 = vadd.f32 %v909, %v1148
    %v1150 = vpop.f32.mrf.mxu0
    %1151 = vmatprep.mubr.f32.mxu0 0.0
    %1152 = vmatmul.mubr.f32.gmra.mxu0 %v960
    %v1153 = vpop.f32.mrf.mxu0
    %v1154 = vadd.f32 %v909, %v1153
    %v1155 = vpop.f32.mrf.mxu0
    %1156 = vmatprep.mubr.f32.mxu0 0.0
    %1157 = vmatmul.mubr.f32.gmra.mxu0 %v963
    %v1158 = vpop.f32.mrf.mxu0
    %v1159 = vadd.f32 %v909, %v1158
    %v1160 = vpop.f32.mrf.mxu0
    %1161 = vmatprep.mubr.f32.mxu0 0.0
    %1162 = vmatmul.mubr.f32.gmra.mxu0 %v966
    %v1163 = vpop.f32.mrf.mxu0
    %v1164 = vadd.f32 %v909, %v1163
    %v1165 = vpop.f32.mrf.mxu0
    %1166 = vmatprep.mubr.f32.mxu0 0.0
    %1167 = vmatmul.mubr.f32.gmra.mxu0 %v969
    %v1168 = vpop.f32.mrf.mxu0
    %v1169 = vadd.f32 %v909, %v1168
    %v1170 = vpop.f32.mrf.mxu0
    %1171 = vmatprep.mubr.f32.mxu0 0.0
    %1172 = vmatmul.mubr.f32.gmra.mxu0 %v972
    %v1173 = vpop.f32.mrf.mxu0
    %v1174 = vadd.f32 %v909, %v1173
    %v1175 = vpop.f32.mrf.mxu0
    %1176 = vmatprep.mubr.f32.mxu0 0.0
    %1177 = vmatmul.mubr.f32.gmra.mxu0 %v975
    %v1178 = vpop.f32.mrf.mxu0
    %v1179 = vadd.f32 %v909, %v1178
    %v1180 = vpop.f32.mrf.mxu0
    %1181 = vmatprep.mubr.f32.mxu0 0.0
    %1182 = vmatmul.mubr.f32.gmra.mxu0 %v978
    %v1183 = vpop.f32.mrf.mxu0
    %v1184 = vadd.f32 %v909, %v1183
    %v1185 = vpop.f32.mrf.mxu0
    %1186 = vmatprep.mubr.f32.mxu0 0.0
    %1187 = vmatmul.mubr.f32.gmra.mxu0 %v981
    %v1188 = vpop.f32.mrf.mxu0
    %v1189 = vadd.f32 %v909, %v1188
    %v1190 = vpop.f32.mrf.mxu0
    %1191 = vmatprep.mubr.f32.mxu0 0.0
    %1192 = vmatmul.mubr.f32.gmra.mxu0 %v984
    %v1193 = vpop.f32.mrf.mxu0
    %v1194 = vadd.f32 %v909, %v1193
    %v1195 = vpop.f32.mrf.mxu0
    %1196 = vmatprep.mubr.f32.mxu0 0.0
    %1197 = vmatmul.mubr.f32.gmra.mxu0 %v987
    %v1198 = vpop.f32.mrf.mxu0
    %v1199 = vadd.f32 %v909, %v1198
    %v1200 = vpop.f32.mrf.mxu0
    %1201 = vmatprep.mubr.f32.mxu0 0.0
    %1202 = vmatmul.mubr.f32.gmra.mxu0 %v990
    %v1203 = vpop.f32.mrf.mxu0
    %v1204 = vadd.f32 %v909, %v1203
    %v1205 = vpop.f32.mrf.mxu0
    %1206 = vmatprep.mubr.f32.mxu0 0.0
    %1207 = vmatmul.mubr.f32.gmra.mxu0 %v993
    %v1208 = vpop.f32.mrf.mxu0
    %v1209 = vadd.f32 %v909, %v1208
    %v1210 = vpop.f32.mrf.mxu0
    %1211 = vmatprep.mubr.f32.mxu0 0.0
    %1212 = vmatmul.mubr.f32.gmra.mxu0 %v996
    %v1213 = vpop.f32.mrf.mxu0
    %v1214 = vadd.f32 %v909, %v1213
    %v1215 = vpop.f32.mrf.mxu0
    %1216 = vmatprep.mubr.f32.mxu0 0.0
    %1217 = vmatmul.mubr.f32.gmra.mxu0 %v999
    %v1218 = vpop.f32.mrf.mxu0
    %v1219 = vadd.f32 %v909, %v1218
    %v1220 = vpop.f32.mrf.mxu0
    %1221 = vmatprep.mubr.f32.mxu0 0.0
    %1222 = vmatmul.mubr.f32.gmra.mxu0 %v1002
    %v1223 = vpop.f32.mrf.mxu0
    %v1224 = vadd.f32 %v909, %v1223
    %v1225 = vpop.f32.mrf.mxu0
    %1226 = vmatprep.mubr.f32.mxu0 0.0
    %1227 = vmatmul.mubr.f32.gmra.mxu0 %v1005
    %v1228 = vpop.f32.mrf.mxu0
    %v1229 = vadd.f32 %v909, %v1228
    %v1230 = vpop.f32.mrf.mxu0
    %1231 = vdwg.mxu0
    %v1232 = vmax.f32 %v1074, 0.0
    %v1233 = vmax.f32 %v1079, 0.0
    %v1234 = vmax.f32 %v1084, 0.0
    %v1235 = vmax.f32 %v1089, 0.0
    %v1236 = vmax.f32 %v1094, 0.0
    %v1237 = vmax.f32 %v1099, 0.0
    %v1238 = vmax.f32 %v1104, 0.0
    %v1239 = vmax.f32 %v1109, 0.0
    %v1240 = vmax.f32 %v1114, 0.0
    %v1241 = vmax.f32 %v1119, 0.0
    %v1242 = vmax.f32 %v1124, 0.0
    %v1243 = vmax.f32 %v1129, 0.0
    %v1244 = vmax.f32 %v1134, 0.0
    %v1245 = vmax.f32 %v1139, 0.0
    %v1246 = vmax.f32 %v1144, 0.0
    %v1247 = vmax.f32 %v1149, 0.0
    %v1248 = vmax.f32 %v1154, 0.0
    %v1249 = vmax.f32 %v1159, 0.0
    %v1250 = vmax.f32 %v1164, 0.0
    %v1251 = vmax.f32 %v1169, 0.0
    %v1252 = vmax.f32 %v1174, 0.0
    %v1253 = vmax.f32 %v1179, 0.0
    %v1254 = vmax.f32 %v1184, 0.0
    %v1255 = vmax.f32 %v1189, 0.0
    %v1256 = vmax.f32 %v1194, 0.0
    %v1257 = vmax.f32 %v1199, 0.0
    %v1258 = vmax.f32 %v1204, 0.0
    %v1259 = vmax.f32 %v1209, 0.0
    %v1260 = vmax.f32 %v1214, 0.0
    %v1261 = vmax.f32 %v1219, 0.0
    %v1262 = vmax.f32 %v1224, 0.0
    %v1263 = vmax.f32 %v1229, 0.0
    %v1264 = vld [vmem:[%s3] sm:$0xff]
    %v1265 = vld [vmem:[%s3 + $0x8] sm:$0xff]
    %v1266 = vld [vmem:[%s3 + $0x10] sm:$0xff]
    %v1267 = vld [vmem:[%s3 + $0x18] sm:$0xff]
    %v1268 = vld [vmem:[%s3 + $0x20] sm:$0xff]
    %v1269 = vld [vmem:[%s3 + $0x28] sm:$0xff]
    %v1270 = vld [vmem:[%s3 + $0x30] sm:$0xff]
    %v1271 = vld [vmem:[%s3 + $0x38] sm:$0xff]
    %v1272 = vld [vmem:[%s3 + $0x40] sm:$0xff]
    %v1273 = vld [vmem:[%s3 + $0x48] sm:$0xff]
    %v1274 = vld [vmem:[%s3 + $0x50] sm:$0xff]
    %v1275 = vld [vmem:[%s3 + $0x58] sm:$0xff]
    %v1276 = vld [vmem:[%s3 + $0x60] sm:$0xff]
    %v1277 = vld [vmem:[%s3 + $0x68] sm:$0xff]
    %v1278 = vld [vmem:[%s3 + $0x70] sm:$0xff]
    %v1279 = vld [vmem:[%s3 + $0x78] sm:$0xff]
    %v1280 = vld [vmem:[%s3 + $0x80] sm:$0xff]
    %v1281 = vld [vmem:[%s3 + $0x88] sm:$0xff]
    %v1282 = vld [vmem:[%s3 + $0x90] sm:$0xff]
    %v1283 = vld [vmem:[%s3 + $0x98] sm:$0xff]
    %v1284 = vld [vmem:[%s3 + $0xa0] sm:$0xff]
    %v1285 = vld [vmem:[%s3 + $0xa8] sm:$0xff]
    %v1286 = vld [vmem:[%s3 + $0xb0] sm:$0xff]
    %v1287 = vld [vmem:[%s3 + $0xb8] sm:$0xff]
    %v1288 = vld [vmem:[%s3 + $0xc0] sm:$0xff]
    %v1289 = vld [vmem:[%s3 + $0xc8] sm:$0xff]
    %v1290 = vld [vmem:[%s3 + $0xd0] sm:$0xff]
    %v1291 = vld [vmem:[%s3 + $0xd8] sm:$0xff]
    %v1292 = vld [vmem:[%s3 + $0xe0] sm:$0xff]
    %v1293 = vld [vmem:[%s3 + $0xe8] sm:$0xff]
    %v1294 = vld [vmem:[%s3 + $0xf0] sm:$0xff]
    %v1295 = vld [vmem:[%s3 + $0xf8] sm:$0xff]
    %1297 = vset.pattern.permute.xlu0 0
    %1298 = vperm.xlu0 %1297, %v1264
    %v1299 = vpop.permute.xlu0 %1298
    %1302 = vset.pattern.permute.xlu0 0
    %1303 = vperm.xlu0 %1302, %v1265
    %v1304 = vpop.permute.xlu0 %1303
    %1307 = vset.pattern.permute.xlu0 0
    %1308 = vperm.xlu0 %1307, %v1266
    %v1309 = vpop.permute.xlu0 %1308
    %1312 = vset.pattern.permute.xlu0 0
    %1313 = vperm.xlu0 %1312, %v1267
    %v1314 = vpop.permute.xlu0 %1313
    %1317 = vset.pattern.permute.xlu0 0
    %1318 = vperm.xlu0 %1317, %v1268
    %v1319 = vpop.permute.xlu0 %1318
    %1322 = vset.pattern.permute.xlu0 0
    %1323 = vperm.xlu0 %1322, %v1269
    %v1324 = vpop.permute.xlu0 %1323
    %1327 = vset.pattern.permute.xlu0 0
    %1328 = vperm.xlu0 %1327, %v1270
    %v1329 = vpop.permute.xlu0 %1328
    %1332 = vset.pattern.permute.xlu0 0
    %1333 = vperm.xlu0 %1332, %v1271
    %v1334 = vpop.permute.xlu0 %1333
    %1337 = vset.pattern.permute.xlu0 0
    %1338 = vperm.xlu0 %1337, %v1272
    %v1339 = vpop.permute.xlu0 %1338
    %1342 = vset.pattern.permute.xlu0 0
    %1343 = vperm.xlu0 %1342, %v1273
    %v1344 = vpop.permute.xlu0 %1343
    %1347 = vset.pattern.permute.xlu0 0
    %1348 = vperm.xlu0 %1347, %v1274
    %v1349 = vpop.permute.xlu0 %1348
    %1352 = vset.pattern.permute.xlu0 0
    %1353 = vperm.xlu0 %1352, %v1275
    %v1354 = vpop.permute.xlu0 %1353
    %1357 = vset.pattern.permute.xlu0 0
    %1358 = vperm.xlu0 %1357, %v1276
    %v1359 = vpop.permute.xlu0 %1358
    %1362 = vset.pattern.permute.xlu0 0
    %1363 = vperm.xlu0 %1362, %v1277
    %v1364 = vpop.permute.xlu0 %1363
    %1367 = vset.pattern.permute.xlu0 0
    %1368 = vperm.xlu0 %1367, %v1278
    %v1369 = vpop.permute.xlu0 %1368
    %1372 = vset.pattern.permute.xlu0 0
    %1373 = vperm.xlu0 %1372, %v1279
    %v1374 = vpop.permute.xlu0 %1373
    %1377 = vset.pattern.permute.xlu0 0
    %1378 = vperm.xlu0 %1377, %v1280
    %v1379 = vpop.permute.xlu0 %1378
    %1382 = vset.pattern.permute.xlu0 0
    %1383 = vperm.xlu0 %1382, %v1281
    %v1384 = vpop.permute.xlu0 %1383
    %1387 = vset.pattern.permute.xlu0 0
    %1388 = vperm.xlu0 %1387, %v1282
    %v1389 = vpop.permute.xlu0 %1388
    %1392 = vset.pattern.permute.xlu0 0
    %1393 = vperm.xlu0 %1392, %v1283
    %v1394 = vpop.permute.xlu0 %1393
    %1397 = vset.pattern.permute.xlu0 0
    %1398 = vperm.xlu0 %1397, %v1284
    %v1399 = vpop.permute.xlu0 %1398
    %1402 = vset.pattern.permute.xlu0 0
    %1403 = vperm.xlu0 %1402, %v1285
    %v1404 = vpop.permute.xlu0 %1403
    %1407 = vset.pattern.permute.xlu0 0
    %1408 = vperm.xlu0 %1407, %v1286
    %v1409 = vpop.permute.xlu0 %1408
    %1412 = vset.pattern.permute.xlu0 0
    %1413 = vperm.xlu0 %1412, %v1287
    %v1414 = vpop.permute.xlu0 %1413
    %1417 = vset.pattern.permute.xlu0 0
    %1418 = vperm.xlu0 %1417, %v1288
    %v1419 = vpop.permute.xlu0 %1418
    %1422 = vset.pattern.permute.xlu0 0
    %1423 = vperm.xlu0 %1422, %v1289
    %v1424 = vpop.permute.xlu0 %1423
    %1427 = vset.pattern.permute.xlu0 0
    %1428 = vperm.xlu0 %1427, %v1290
    %v1429 = vpop.permute.xlu0 %1428
    %1432 = vset.pattern.permute.xlu0 0
    %1433 = vperm.xlu0 %1432, %v1291
    %v1434 = vpop.permute.xlu0 %1433
    %1437 = vset.pattern.permute.xlu0 0
    %1438 = vperm.xlu0 %1437, %v1292
    %v1439 = vpop.permute.xlu0 %1438
    %1442 = vset.pattern.permute.xlu0 0
    %1443 = vperm.xlu0 %1442, %v1293
    %v1444 = vpop.permute.xlu0 %1443
    %1447 = vset.pattern.permute.xlu0 0
    %1448 = vperm.xlu0 %1447, %v1294
    %v1449 = vpop.permute.xlu0 %1448
    %1452 = vset.pattern.permute.xlu0 0
    %1453 = vperm.xlu0 %1452, %v1295
    %v1454 = vpop.permute.xlu0 %1453
    %v1456 = vmul.f32 %v1232, %v1299
    %v1457 = vmul.f32 %v1233, %v1304
    %v1458 = vmul.f32 %v1234, %v1309
    %v1459 = vmul.f32 %v1235, %v1314
    %v1460 = vmul.f32 %v1236, %v1319
    %v1461 = vmul.f32 %v1237, %v1324
    %v1462 = vmul.f32 %v1238, %v1329
    %v1463 = vmul.f32 %v1239, %v1334
    %v1464 = vmul.f32 %v1240, %v1339
    %v1465 = vmul.f32 %v1241, %v1344
    %v1466 = vmul.f32 %v1242, %v1349
    %v1467 = vmul.f32 %v1243, %v1354
    %v1468 = vmul.f32 %v1244, %v1359
    %v1469 = vmul.f32 %v1245, %v1364
    %v1470 = vmul.f32 %v1246, %v1369
    %v1471 = vmul.f32 %v1247, %v1374
    %v1472 = vmul.f32 %v1248, %v1379
    %v1473 = vmul.f32 %v1249, %v1384
    %v1474 = vmul.f32 %v1250, %v1389
    %v1475 = vmul.f32 %v1251, %v1394
    %v1476 = vmul.f32 %v1252, %v1399
    %v1477 = vmul.f32 %v1253, %v1404
    %v1478 = vmul.f32 %v1254, %v1409
    %v1479 = vmul.f32 %v1255, %v1414
    %v1480 = vmul.f32 %v1256, %v1419
    %v1481 = vmul.f32 %v1257, %v1424
    %v1482 = vmul.f32 %v1258, %v1429
    %v1483 = vmul.f32 %v1259, %v1434
    %v1484 = vmul.f32 %v1260, %v1439
    %v1485 = vmul.f32 %v1261, %v1444
    %v1486 = vmul.f32 %v1262, %v1449
    %v1487 = vmul.f32 %v1263, %v1454
    %v1488 = vpack.c.bf16 %v1457, %v1456
    %v1489 = vpack.c.bf16 %v1459, %v1458
    %v1490 = vpack.c.bf16 %v1461, %v1460
    %v1491 = vpack.c.bf16 %v1463, %v1462
    %v1492 = vpack.c.bf16 %v1465, %v1464
    %v1493 = vpack.c.bf16 %v1467, %v1466
    %v1494 = vpack.c.bf16 %v1469, %v1468
    %v1495 = vpack.c.bf16 %v1471, %v1470
    %v1496 = vpack.c.bf16 %v1473, %v1472
    %v1497 = vpack.c.bf16 %v1475, %v1474
    %v1498 = vpack.c.bf16 %v1477, %v1476
    %v1499 = vpack.c.bf16 %v1479, %v1478
    %v1500 = vpack.c.bf16 %v1481, %v1480
    %v1501 = vpack.c.bf16 %v1483, %v1482
    %v1502 = vpack.c.bf16 %v1485, %v1484
    %v1503 = vpack.c.bf16 %v1487, %v1486
    %v1520 = vunpack.c.l.b16 %v1488
    %v1521 = vunpack.c.h.b16 %v1488
    %v1522 = vunpack.c.l.b16 %v1489
    %v1523 = vunpack.c.h.b16 %v1489
    %v1524 = vunpack.c.l.b16 %v1490
    %v1525 = vunpack.c.h.b16 %v1490
    %v1526 = vunpack.c.l.b16 %v1491
    %v1527 = vunpack.c.h.b16 %v1491
    %v1528 = vunpack.c.l.b16 %v1492
    %v1529 = vunpack.c.h.b16 %v1492
    %v1530 = vunpack.c.l.b16 %v1493
    %v1531 = vunpack.c.h.b16 %v1493
    %v1532 = vunpack.c.l.b16 %v1494
    %v1533 = vunpack.c.h.b16 %v1494
    %v1534 = vunpack.c.l.b16 %v1495
    %v1535 = vunpack.c.h.b16 %v1495
    %v1536 = vunpack.c.l.b16 %v1496
    %v1537 = vunpack.c.h.b16 %v1496
    %v1538 = vunpack.c.l.b16 %v1497
    %v1539 = vunpack.c.h.b16 %v1497
    %v1540 = vunpack.c.l.b16 %v1498
    %v1541 = vunpack.c.h.b16 %v1498
    %v1542 = vunpack.c.l.b16 %v1499
    %v1543 = vunpack.c.h.b16 %v1499
    %v1544 = vunpack.c.l.b16 %v1500
    %v1545 = vunpack.c.h.b16 %v1500
    %v1546 = vunpack.c.l.b16 %v1501
    %v1547 = vunpack.c.h.b16 %v1501
    %v1548 = vunpack.c.l.b16 %v1502
    %v1549 = vunpack.c.h.b16 %v1502
    %v1550 = vunpack.c.l.b16 %v1503
    %v1551 = vunpack.c.h.b16 %v1503
    %v1552 = vpack.c.b16 %v1520, %v1520
    %v1553 = vpack.c.b16 %v1521, %v1521
    %v1554 = vpack.c.b16 %v1522, %v1522
    %v1555 = vpack.c.b16 %v1523, %v1523
    %v1556 = vpack.c.b16 %v1524, %v1524
    %v1557 = vpack.c.b16 %v1525, %v1525
    %v1558 = vpack.c.b16 %v1526, %v1526
    %v1559 = vpack.c.b16 %v1527, %v1527
    %v1560 = vpack.c.b16 %v1528, %v1528
    %v1561 = vpack.c.b16 %v1529, %v1529
    %v1562 = vpack.c.b16 %v1530, %v1530
    %v1563 = vpack.c.b16 %v1531, %v1531
    %v1564 = vpack.c.b16 %v1532, %v1532
    %v1565 = vpack.c.b16 %v1533, %v1533
    %v1566 = vpack.c.b16 %v1534, %v1534
    %v1567 = vpack.c.b16 %v1535, %v1535
    %v1568 = vpack.c.b16 %v1536, %v1536
    %v1569 = vpack.c.b16 %v1537, %v1537
    %v1570 = vpack.c.b16 %v1538, %v1538
    %v1571 = vpack.c.b16 %v1539, %v1539
    %v1572 = vpack.c.b16 %v1540, %v1540
    %v1573 = vpack.c.b16 %v1541, %v1541
    %v1574 = vpack.c.b16 %v1542, %v1542
    %v1575 = vpack.c.b16 %v1543, %v1543
    %v1576 = vpack.c.b16 %v1544, %v1544
    %v1577 = vpack.c.b16 %v1545, %v1545
    %v1578 = vpack.c.b16 %v1546, %v1546
    %v1579 = vpack.c.b16 %v1547, %v1547
    %v1580 = vpack.c.b16 %v1548, %v1548
    %v1581 = vpack.c.b16 %v1549, %v1549
    %v1582 = vpack.c.b16 %v1550, %v1550
    %v1583 = vpack.c.b16 %v1551, %v1551
    %vm1616 = vcmask 125952
    %1617 = vst.msk [vmem:[%s6] sm:$0xf] %vm1616, %v1552
    %1618 = vst.msk [vmem:[%s6 + $0x4] sm:$0xf] %vm1616, %v1553
    %1619 = vst.msk [vmem:[%s6 + $0x8] sm:$0xf] %vm1616, %v1554
    %1620 = vst.msk [vmem:[%s6 + $0xc] sm:$0xf] %vm1616, %v1555
    %1621 = vst.msk [vmem:[%s6 + $0x10] sm:$0xf] %vm1616, %v1556
    %1622 = vst.msk [vmem:[%s6 + $0x14] sm:$0xf] %vm1616, %v1557
    %1623 = vst.msk [vmem:[%s6 + $0x18] sm:$0xf] %vm1616, %v1558
    %1624 = vst.msk [vmem:[%s6 + $0x1c] sm:$0xf] %vm1616, %v1559
    %1625 = vst.msk [vmem:[%s6 + $0x20] sm:$0xf] %vm1616, %v1560
    %1626 = vst.msk [vmem:[%s6 + $0x24] sm:$0xf] %vm1616, %v1561
    %1627 = vst.msk [vmem:[%s6 + $0x28] sm:$0xf] %vm1616, %v1562
    %1628 = vst.msk [vmem:[%s6 + $0x2c] sm:$0xf] %vm1616, %v1563
    %1629 = vst.msk [vmem:[%s6 + $0x30] sm:$0xf] %vm1616, %v1564
    %1630 = vst.msk [vmem:[%s6 + $0x34] sm:$0xf] %vm1616, %v1565
    %1631 = vst.msk [vmem:[%s6 + $0x38] sm:$0xf] %vm1616, %v1566
    %1632 = vst.msk [vmem:[%s6 + $0x3c] sm:$0xf] %vm1616, %v1567
    %1633 = vst.msk [vmem:[%s6 + $0x40] sm:$0xf] %vm1616, %v1568
    %1634 = vst.msk [vmem:[%s6 + $0x44] sm:$0xf] %vm1616, %v1569
    %1635 = vst.msk [vmem:[%s6 + $0x48] sm:$0xf] %vm1616, %v1570
    %1636 = vst.msk [vmem:[%s6 + $0x4c] sm:$0xf] %vm1616, %v1571
    %1637 = vst.msk [vmem:[%s6 + $0x50] sm:$0xf] %vm1616, %v1572
    %1638 = vst.msk [vmem:[%s6 + $0x54] sm:$0xf] %vm1616, %v1573
    %1639 = vst.msk [vmem:[%s6 + $0x58] sm:$0xf] %vm1616, %v1574
    %1640 = vst.msk [vmem:[%s6 + $0x5c] sm:$0xf] %vm1616, %v1575
    %1641 = vst.msk [vmem:[%s6 + $0x60] sm:$0xf] %vm1616, %v1576
    %1642 = vst.msk [vmem:[%s6 + $0x64] sm:$0xf] %vm1616, %v1577
    %1643 = vst.msk [vmem:[%s6 + $0x68] sm:$0xf] %vm1616, %v1578
    %1644 = vst.msk [vmem:[%s6 + $0x6c] sm:$0xf] %vm1616, %v1579
    %1645 = vst.msk [vmem:[%s6 + $0x70] sm:$0xf] %vm1616, %v1580
    %1646 = vst.msk [vmem:[%s6 + $0x74] sm:$0xf] %vm1616, %v1581
    %1647 = vst.msk [vmem:[%s6 + $0x78] sm:$0xf] %vm1616, %v1582
    %1648 = vst.msk [vmem:[%s6 + $0x7c] sm:$0xf] %vm1616, %v1583
  $region33: #{tpu_custom_call.1} parent=0 // pred_fallthru
    _
  // Predicated region
  $region34: #{tpu_custom_call.1} parent=0 // pred_check
    _
  $region35: #{tpu_custom_call.1} parent=0 // pred_check_branch
    %1650 = sbr.rel (0) target = $region37
  $region36: #{tpu_custom_call.1} parent=0 // pred_region
    _
  $region37: #{tpu_custom_call.1} parent=0 // pred_fallthru
    _
  // Predicated region
  $region38: #{tpu_custom_call.1} parent=0 // pred_check
    _
  $region39: #{tpu_custom_call.1} parent=0 // pred_check_branch
    %1652 = sbr.rel (0) target = $region41
  $region40: #{tpu_custom_call.1} parent=0 // pred_region
    _
  $region41: #{tpu_custom_call.1} parent=0 // pred_fallthru
    _

</llo_original>
